<compile_context>
chip_gen: v7x
topology: tpu7x:2x2x1
jax: 0.10.0
libtpu: 0.0.40
codegen_flags: <defaults>
</compile_context>

<pallas_src>
import functools

import jax
import jax.numpy as jnp
from jax.experimental import pallas as pl
from jax.experimental.pallas import tpu as pltpu


# ----------------------------- fused Pallas kernel -----------------------------

def _block_kernel(x_ref, w1_ref, dww_ref, dwb_ref, w2_ref, b2_ref, se1_ref, se2_ref,
                  *rest, H, W, stride, B, identity_res, pad_left):
    rest = list(rest)
    sel_ref = rest.pop(0) if stride > 1 else None
    if not identity_res:
        wr_ref = rest.pop(0)
        br_ref = rest.pop(0)
    o_ref = rest.pop(0)
    pad_ref = rest.pop(0)                # VMEM scratch: (C, pad_left + HW + W + 1), bf16

    HW = H * W
    C = x_ref.shape[1]
    npix = o_ref.shape[2] // B

    # Zero ONLY the pad margins; the interior is fully overwritten for every image.
    # Done every step (cheap: (C, pad_left) + (C, W+1) bf16 stores) so correctness does
    # not depend on grid-iteration order -> batch axis stays "parallel" for v7x megacore.
    pad_ref[:, :pad_left] = jnp.zeros((C, pad_left), pad_ref.dtype)
    pad_ref[:, pad_left + HW:pad_left + HW + W + 1] = jnp.zeros((C, W + 1), pad_ref.dtype)

    # Hoisted loop invariants.
    col = jax.lax.broadcasted_iota(jnp.int32, (C, HW), 1) % W
    mask_l = col >= 1                    # valid positions for dx = -1 taps
    mask_r = col <= W - 2                # valid positions for dx = +1 taps
    dww = dww_ref[...]                   # (C, 9), BN scale already folded in
    dwb = dwb_ref[...]                   # (C, 1)
    b2 = b2_ref[...]                     # (Cout, 1)
    se1 = se1_ref[...]                   # (Cout, Cmid)
    se2 = se2_ref[...]                   # (Cout, Cmid)
    sel = sel_ref[...] if stride > 1 else None   # (HW, npix) one-hot, bf16
    inv_npix = 1.0 / npix

    for b in range(B):                   # static unroll over images in this grid step
        xb = x_ref[b]                    # (C, HW) f32

        # ---- Pw1: 1x1 conv (no BN, no activation) on the MXU ----
        y1 = jnp.dot(w1_ref[...], xb, preferred_element_type=jnp.float32)    # (C, HW)

        # Interior of the zero-padded flat image, stored bf16 (aligned: pad_left % 128 == 0).
        pad_ref[:, pad_left:pad_left + HW] = y1.astype(pad_ref.dtype)

        # ---- Dw: depthwise 3x3 as 9 shifted taps over the padded flat image.  Taps are
        #      grouped by dx so each column mask is applied once per group. ----
        # TODO(synk): for stride>1 the depthwise still evaluates all HW pixels; folding the
        #             row subsample into the tap reads would cut this VALU work ~stride x.
        acc = None
        for dx in (-1, 0, 1):
            grp = None
            for dy in (-1, 0, 1):
                k = (dy + 1) * 3 + (dx + 1)
                start = pad_left + dy * W + dx
                tap = pad_ref[:, start:start + HW].astype(jnp.float32)       # f32 MAC (v5e)
                term = tap * dww[:, k:k + 1]
                grp = term if grp is None else grp + term
            if dx == -1:
                grp = jnp.where(mask_l, grp, 0.0)
            elif dx == 1:
                grp = jnp.where(mask_r, grp, 0.0)
            acc = grp if acc is None else acc + grp
        y2 = jnp.maximum(acc + dwb, 0.0)                                     # (C, HW)

        # ---- stride > 1: pixel subsample via ONE fused one-hot selection matmul for both
        #      the main path and the residual input (2C live MXU rows, single push). ----
        if stride > 1:
            comb = jnp.concatenate(
                [y2.astype(jnp.bfloat16), xb.astype(jnp.bfloat16)], axis=0)  # (2C, HW)
            comb = jnp.dot(comb, sel, preferred_element_type=jnp.float32)    # (2C, npix)
            y2s, xrs = comb[:C], comb[C:]
        else:
            y2s, xrs = y2, xb

        # ---- Pw2: 1x1 conv + folded BN + ReLU ----
        y3 = jnp.dot(w2_ref[...], y2s, preferred_element_type=jnp.float32)   # (Cout, npix)
        y3 = jnp.maximum(y3 + b2, 0.0)

        # ---- residual branch ----
        if identity_res:
            res = xb
        else:
            res = jnp.dot(wr_ref[...], xrs, preferred_element_type=jnp.float32)
            res = jnp.maximum(res + br_ref[...], 0.0)

        # ---- SE: avg-pool -> FC -> ReLU -> FC -> sigmoid -> scale, + residual add ----
        pooled = jnp.sum(y3, axis=1, keepdims=True) * inv_npix               # (Cout, 1)
        h = jnp.maximum(jnp.sum(se1 * pooled, axis=0, keepdims=True), 0.0)   # (1, Cmid)
        z = jnp.sum(se2 * h, axis=1, keepdims=True)                          # (Cout, 1)
        gate = 1.0 / (1.0 + jnp.exp(-z))

        o_ref[0, :, b * npix:(b + 1) * npix] = (y3 * gate + res).astype(o_ref.dtype)


# ----------------------------- block forward (wrapper) -----------------------------

def fr_pdp_block_forward(x_nchw, params, *, stride, in_channels, out_channels):
    N, C, H, W = x_nchw.shape
    assert C == in_channels
    HW = H * W
    Ho = (H - 1) // stride + 1            # conv output size with k=3, pad=1
    Wo = (W - 1) // stride + 1
    npix = Ho * Wo
    identity_res = (stride == 1 and in_channels == out_channels)
    use_sel = stride > 1
    pad_left = ((W + 1 + 127) // 128) * 128   # lane-aligned interior write offset

    # Images per grid step: smallest B (dividing N) with a >=128-lane output slab.
    # Keeps the grid as long as possible otherwise (feeds both v7x TensorCores).
    B = 1
    while B * npix < 128 and B < N:
        B += 1
    while N % B != 0:
        B += 1
    B = min(B, N)
    G = N // B

    # NCHW -> (N, C, H*W) is a free bitcast (no transpose, no extra HBM pass).
    # x/out kept f32 to preserve exact residual-add semantics; scratch & sel are bf16.
    x2 = x_nchw.reshape(N, C, HW).astype(jnp.float32)

    # Fold BN scales into the weights (constant folding on tiny arrays).
    dw_wf = (params["dw_w"] * params["dw_scale"]).astype(jnp.float32)        # (C, 9)
    pw2_wf = (params["pw2_w"] * params["pw2_scale"]).astype(jnp.float32)     # (Cout, Cin)

    def full(a):
        nd = a.ndim
        return pl.BlockSpec(a.shape, lambda g, _nd=nd: (0,) * _nd)

    inputs = [x2, params["pw1_w"], dw_wf, params["dw_bias"], pw2_wf, params["pw2_bias"],
              params["se_w1"], params["se_w2"]]
    in_specs = [pl.BlockSpec((B, C, HW), lambda g: (g, 0, 0))]
    in_specs += [full(a) for a in inputs[1:]]

    if use_sel:
        # One-hot subsample matrix, bf16 (0/1 exact).  NOTE: sel is (HW, npix) and grows
        # quadratically with spatial size -- re-derive the VMEM budget on v7x (64 MiB).
        ii = jnp.arange(Ho) * stride
        jj = jnp.arange(Wo) * stride
        flat = (ii[:, None] * W + jj[None, :]).reshape(-1)                   # (npix,)
        sel = (jnp.arange(HW)[:, None] == flat[None, :]).astype(jnp.bfloat16)
        inputs.append(sel)
        in_specs.append(full(sel))
    if not identity_res:
        pwr_wf = (params["pwr_w"] * params["pwr_scale"]).astype(jnp.float32)
        inputs.append(pwr_wf)
        in_specs.append(full(pwr_wf))
        inputs.append(params["pwr_bias"])
        in_specs.append(full(params["pwr_bias"]))

    out = pl.pallas_call(
        functools.partial(_block_kernel, H=H, W=W, stride=stride, B=B,
                          identity_res=identity_res, pad_left=pad_left),
        out_shape=jax.ShapeDtypeStruct((G, out_channels, B * npix), jnp.float32),
        grid_spec=pltpu.PrefetchScalarGridSpec(
            num_scalar_prefetch=0,
            grid=(G,),                    # B images per step; weights stay VMEM-resident
            in_specs=in_specs,
            out_specs=pl.BlockSpec((1, out_channels, B * npix), lambda g: (g, 0, 0)),
            scratch_shapes=[pltpu.VMEM((C, pad_left + HW + W + 1), jnp.bfloat16)],
        ),
        compiler_params=pltpu.CompilerParams(dimension_semantics=("parallel",)),
    )(*inputs)

    # (G, Cout, B*npix) -> NCHW; cheap layout plumbing outside the kernel.
    out = out.reshape(G, out_channels, B, npix).transpose(0, 2, 1, 3)
    return out.reshape(N, out_channels, Ho, Wo)


# ----------------------------- parameters -----------------------------

def _fold_bn(key, c, eps=1e-5):
    k1, k2, k3, k4 = jax.random.split(key, 4)
    gamma = 1.0 + 0.1 * jax.random.normal(k1, (c,), jnp.float32)
    beta = 0.1 * jax.random.normal(k2, (c,), jnp.float32)
    mean = 0.1 * jax.random.normal(k3, (c,), jnp.float32)
    var = 0.5 + 0.5 * jax.random.uniform(k4, (c,), jnp.float32)
    scale = gamma / jnp.sqrt(var + eps)
    bias = beta - mean * scale
    return scale.reshape(c, 1), bias.reshape(c, 1)


def init_params(key, in_channels, out_channels):
    ks = jax.random.split(key, 8)
    cmid = max(out_channels // 16, 1)
    p = {}
    # 1x1 conv weights stored as (Cout, Cin); depthwise taps as (Cin, 9) with k = dy*3+dx.
    p["pw1_w"] = jax.random.normal(ks[0], (in_channels, in_channels), jnp.float32) / jnp.sqrt(in_channels)
    p["dw_w"] = jax.random.normal(ks[1], (in_channels, 9), jnp.float32) / 3.0
    p["dw_scale"], p["dw_bias"] = _fold_bn(ks[2], in_channels)
    p["pw2_w"] = jax.random.normal(ks[3], (out_channels, in_channels), jnp.float32) / jnp.sqrt(in_channels)
    p["pw2_scale"], p["pw2_bias"] = _fold_bn(ks[4], out_channels)
    p["pwr_w"] = jax.random.normal(ks[5], (out_channels, in_channels), jnp.float32) / jnp.sqrt(in_channels)
    p["pwr_scale"], p["pwr_bias"] = _fold_bn(ks[6], out_channels)
    k7, k8 = jax.random.split(ks[7])
    # SE FCs stored channels-on-sublane: h[m] = sum_c se_w1[c,m]*pool[c]; z[c] = sum_m se_w2[c,m]*h[m]
    p["se_w1"] = jax.random.normal(k7, (out_channels, cmid), jnp.float32) / jnp.sqrt(out_channels)
    p["se_w2"] = jax.random.normal(k8, (out_channels, cmid), jnp.float32) / jnp.sqrt(cmid)
    return p


# ----------------------------- pure-JAX reference -----------------------------

def ref_forward(x_nchw, params, *, stride, in_channels, out_channels):
    hp = jax.lax.Precision.HIGHEST
    x = x_nchw.astype(jnp.float32)
    N, C, H, W = x.shape
    y = jnp.einsum("oc,nchw->nohw", params["pw1_w"], x, precision=hp)
    yp = jnp.pad(y, ((0, 0), (0, 0), (1, 1), (1, 1)))
    acc = None
    for dy in range(3):
        for dx in range(3):
            patch = yp[:, :, dy:dy + H:stride, dx:dx + W:stride]
            term = patch * params["dw_w"][:, dy * 3 + dx].reshape(1, C, 1, 1)
            acc = term if acc is None else acc + term
    acc = acc * params["dw_scale"].reshape(1, C, 1, 1) + params["dw_bias"].reshape(1, C, 1, 1)
    y = jnp.maximum(acc, 0.0)
    y = jnp.einsum("oc,nchw->nohw", params["pw2_w"], y, precision=hp)
    y = y * params["pw2_scale"].reshape(1, -1, 1, 1) + params["pw2_bias"].reshape(1, -1, 1, 1)
    y = jnp.maximum(y, 0.0)
    pooled = jnp.mean(y, axis=(2, 3))                                        # (N, Cout)
    h = jnp.maximum(jnp.einsum("cm,nc->nm", params["se_w1"], pooled, precision=hp), 0.0)
    gate = 1.0 / (1.0 + jnp.exp(-jnp.einsum("cm,nm->nc", params["se_w2"], h, precision=hp)))
    y = y * gate[:, :, None, None]
    if stride == 1 and in_channels == out_channels:
        res = x
    else:
        r = x[:, :, ::stride, ::stride]
        r = jnp.einsum("oc,nchw->nohw", params["pwr_w"], r, precision=hp)
        r = r * params["pwr_scale"].reshape(1, -1, 1, 1) + params["pwr_bias"].reshape(1, -1, 1, 1)
        res = jnp.maximum(r, 0.0)
    return y + res


# ----------------------------- main -----------------------------

if __name__ == "__main__":
    key = jax.random.PRNGKey(0)
    kx, kp = jax.random.split(key)

    fwd = jax.jit(fr_pdp_block_forward,
                  static_argnames=("stride", "in_channels", "out_channels"))

    configs = [
        dict(in_channels=32, out_channels=32, stride=1),   # identity residual path
        dict(in_channels=32, out_channels=64, stride=2),   # strided PwR residual path
    ]

    for cfg in configs:
        x = jax.random.normal(kx, (2, cfg["in_channels"], 16, 16), jnp.float32)  # NCHW input
        params = init_params(kp, cfg["in_channels"], cfg["out_channels"])

        out = fwd(x, params, stride=cfg["stride"],
                  in_channels=cfg["in_channels"],
                  out_channels=cfg["out_channels"])
        out = jax.block_until_ready(out)

        ref = ref_forward(x, params, stride=cfg["stride"],
                          in_channels=cfg["in_channels"],
                          out_channels=cfg["out_channels"])
        assert out.shape == ref.shape, (out.shape, ref.shape)
        max_err = float(jnp.max(jnp.abs(out - ref)))
        # tolerance sized for default-precision MXU matmuls + bf16 scratch vs HIGHEST f32 ref
        assert jnp.allclose(out, ref, rtol=2e-2, atol=1e-2), f"max abs err {max_err}"

    print("KERNEL_OK")
</pallas_src>

<mosaic_0001>
module attributes {stable_mosaic.version = 11 : i64} {
  func.func @_block_kernel(%arg0: i32, %arg1: memref<1x32x256xf32, #tpu.memory_space<vmem>>, %arg2: memref<32x32xf32, #tpu.memory_space<vmem>>, %arg3: memref<32x9xf32, #tpu.memory_space<vmem>>, %arg4: memref<32x1xf32, #tpu.memory_space<vmem>>, %arg5: memref<32x32xf32, #tpu.memory_space<vmem>>, %arg6: memref<32x1xf32, #tpu.memory_space<vmem>>, %arg7: memref<32x2xf32, #tpu.memory_space<vmem>>, %arg8: memref<32x2xf32, #tpu.memory_space<vmem>>, %arg9: memref<1x32x256xf32, #tpu.memory_space<vmem>>, %arg10: memref<32x401xbf16, #tpu.memory_space<vmem>>) attributes {dimension_semantics = [#tpu.dimension_semantics<parallel>], iteration_bounds = array<i64: 2>, scalar_prefetch = 0 : i64, scratch_operands = 1 : i64, tpu.core_type = #tpu.core_type<tc>, window_params = [{transform_indices = @transform_0, window_bounds = array<i64: 1, 32, 256>}, {pipeline_mode = #tpu.pipeline_mode<synchronous>, transform_indices = @transform_1, window_bounds = array<i64: 32, 32>}, {pipeline_mode = #tpu.pipeline_mode<synchronous>, transform_indices = @transform_2, window_bounds = array<i64: 32, 9>}, {pipeline_mode = #tpu.pipeline_mode<synchronous>, transform_indices = @transform_3, window_bounds = array<i64: 32, 1>}, {pipeline_mode = #tpu.pipeline_mode<synchronous>, transform_indices = @transform_4, window_bounds = array<i64: 32, 32>}, {pipeline_mode = #tpu.pipeline_mode<synchronous>, transform_indices = @transform_5, window_bounds = array<i64: 32, 1>}, {pipeline_mode = #tpu.pipeline_mode<synchronous>, transform_indices = @transform_6, window_bounds = array<i64: 32, 2>}, {pipeline_mode = #tpu.pipeline_mode<synchronous>, transform_indices = @transform_7, window_bounds = array<i64: 32, 2>}, {transform_indices = @transform_8, window_bounds = array<i64: 1, 32, 256>}]} {
    %cst = arith.constant 0.000000e+00 : bf16
    %0 = vector.broadcast %cst : bf16 to vector<32x128xbf16>
    %c0 = arith.constant 0 : index
    %c0_0 = arith.constant 0 : index
    %1 = vector.load %arg10[%c0, %c0_0] : memref<32x401xbf16, #tpu.memory_space<vmem>>, vector<32x128xbf16>
    tpu.vector_store %arg10[%c0, %c0_0], %0 {strides = array<i32>} : memref<32x401xbf16, #tpu.memory_space<vmem>>, vector<32x128xbf16>,
    %cst_1 = arith.constant 0.000000e+00 : bf16
    %2 = vector.broadcast %cst_1 : bf16 to vector<32x17xbf16>
    %c0_2 = arith.constant 0 : index
    %c384 = arith.constant 384 : index
    %3 = vector.load %arg10[%c0_2, %c384] : memref<32x401xbf16, #tpu.memory_space<vmem>>, vector<32x17xbf16>
    tpu.vector_store %arg10[%c0_2, %c384], %2 {strides = array<i32>} : memref<32x401xbf16, #tpu.memory_space<vmem>>, vector<32x17xbf16>,
    %4 = tpu.iota {dimensions = array<i32: 1>} : vector<32x256xi32>
    %c16_i32 = arith.constant 16 : i32
    %c0_i32 = arith.constant 0 : i32
    %5 = arith.cmpi eq, %c16_i32, %c0_i32 : i32
    %c1_i32 = arith.constant 1 : i32
    %6 = arith.select %5, %c1_i32, %c16_i32 : i32
    %7 = vector.broadcast %6 : i32 to vector<32x256xi32>
    %8 = arith.remsi %4, %7 : vector<32x256xi32>
    %c0_i32_3 = arith.constant 0 : i32
    %9 = vector.broadcast %c0_i32_3 : i32 to vector<32x256xi32>
    %10 = arith.cmpi ne, %8, %9 : vector<32x256xi32>
    %c0_i32_4 = arith.constant 0 : i32
    %11 = vector.broadcast %c0_i32_4 : i32 to vector<32x256xi32>
    %12 = arith.cmpi slt, %8, %11 : vector<32x256xi32>
    %c0_i32_5 = arith.constant 0 : i32
    %13 = arith.cmpi slt, %6, %c0_i32_5 : i32
    %14 = vector.broadcast %13 : i1 to vector<32x256xi1>
    %15 = vector.broadcast %14 : vector<32x256xi1> to vector<32x256xi1>
    %16 = arith.xori %12, %15 : vector<32x256xi1>
    %17 = arith.andi %16, %10 : vector<32x256xi1>
    %18 = vector.broadcast %6 : i32 to vector<32x256xi32>
    %19 = arith.addi %8, %18 : vector<32x256xi32>
    %20 = arith.select %17, %19, %8 : vector<32x256xi1>, vector<32x256xi32>
    %c1_i32_6 = arith.constant 1 : i32
    %21 = vector.broadcast %c1_i32_6 : i32 to vector<32x256xi32>
    %22 = arith.cmpi sge, %20, %21 : vector<32x256xi32>
    %c14_i32 = arith.constant 14 : i32
    %23 = vector.broadcast %c14_i32 : i32 to vector<32x256xi32>
    %24 = arith.cmpi sle, %20, %23 : vector<32x256xi32>
    %c0_7 = arith.constant 0 : index
    %c0_8 = arith.constant 0 : index
    %25 = vector.load %arg3[%c0_7, %c0_8] : memref<32x9xf32, #tpu.memory_space<vmem>>, vector<32x9xf32>
    %c0_9 = arith.constant 0 : index
    %c0_10 = arith.constant 0 : index
    %26 = vector.load %arg4[%c0_9, %c0_10] : memref<32x1xf32, #tpu.memory_space<vmem>>, vector<32x1xf32>
    %c0_11 = arith.constant 0 : index
    %c0_12 = arith.constant 0 : index
    %27 = vector.load %arg6[%c0_11, %c0_12] : memref<32x1xf32, #tpu.memory_space<vmem>>, vector<32x1xf32>
    %c0_13 = arith.constant 0 : index
    %c0_14 = arith.constant 0 : index
    %28 = vector.load %arg7[%c0_13, %c0_14] : memref<32x2xf32, #tpu.memory_space<vmem>>, vector<32x2xf32>
    %c0_15 = arith.constant 0 : index
    %c0_16 = arith.constant 0 : index
    %29 = vector.load %arg8[%c0_15, %c0_16] : memref<32x2xf32, #tpu.memory_space<vmem>>, vector<32x2xf32>
    %c0_17 = arith.constant 0 : index
    %c0_18 = arith.constant 0 : index
    %c0_19 = arith.constant 0 : index
    %30 = vector.load %arg1[%c0_17, %c0_18, %c0_19] : memref<1x32x256xf32, #tpu.memory_space<vmem>>, vector<1x32x256xf32>
    %31 = vector.shape_cast %30 : vector<1x32x256xf32> to vector<32x256xf32>
    %c0_20 = arith.constant 0 : index
    %c0_21 = arith.constant 0 : index
    %32 = vector.load %arg2[%c0_20, %c0_21] : memref<32x32xf32, #tpu.memory_space<vmem>>, vector<32x32xf32>
    %cst_22 = arith.constant dense<0.000000e+00> : vector<32x256xf32>
    %33 = tpu.matmul %32, %31, %cst_22 {dimension_numbers = #tpu.dot_dimension_numbers<[1], [0], [0], [1], [0, 0, 1, 1], [], []>} : vector<32x32xf32>, vector<32x256xf32>, vector<32x256xf32> -> vector<32x256xf32>
    %34 = arith.truncf %33 : vector<32x256xf32> to vector<32x256xbf16>
    %c0_23 = arith.constant 0 : index
    %c128 = arith.constant 128 : index
    %35 = vector.load %arg10[%c0_23, %c128] : memref<32x401xbf16, #tpu.memory_space<vmem>>, vector<32x256xbf16>
    tpu.vector_store %arg10[%c0_23, %c128], %34 {strides = array<i32>} : memref<32x401xbf16, #tpu.memory_space<vmem>>, vector<32x256xbf16>,
    %c0_24 = arith.constant 0 : index
    %c111 = arith.constant 111 : index
    %36 = vector.load %arg10[%c0_24, %c111] : memref<32x401xbf16, #tpu.memory_space<vmem>>, vector<32x256xbf16>
    %37 = arith.extf %36 : vector<32x256xbf16> to vector<32x256xf32>
    %38 = vector.extract_strided_slice %25 {offsets = [0, 0], sizes = [32, 1], strides = [1, 1]} : vector<32x9xf32> to vector<32x1xf32>
    %39 = vector.broadcast %38 : vector<32x1xf32> to vector<32x256xf32>
    %40 = arith.mulf %37, %39 : vector<32x256xf32>
    %c0_25 = arith.constant 0 : index
    %c127 = arith.constant 127 : index
    %41 = vector.load %arg10[%c0_25, %c127] : memref<32x401xbf16, #tpu.memory_space<vmem>>, vector<32x256xbf16>
    %42 = arith.extf %41 : vector<32x256xbf16> to vector<32x256xf32>
    %43 = vector.extract_strided_slice %25 {offsets = [0, 3], sizes = [32, 1], strides = [1, 1]} : vector<32x9xf32> to vector<32x1xf32>
    %44 = vector.broadcast %43 : vector<32x1xf32> to vector<32x256xf32>
    %45 = arith.mulf %42, %44 : vector<32x256xf32>
    %46 = arith.addf %40, %45 : vector<32x256xf32>
    %c0_26 = arith.constant 0 : index
    %c143 = arith.constant 143 : index
    %47 = vector.load %arg10[%c0_26, %c143] : memref<32x401xbf16, #tpu.memory_space<vmem>>, vector<32x256xbf16>
    %48 = arith.extf %47 : vector<32x256xbf16> to vector<32x256xf32>
    %49 = vector.extract_strided_slice %25 {offsets = [0, 6], sizes = [32, 1], strides = [1, 1]} : vector<32x9xf32> to vector<32x1xf32>
    %50 = vector.broadcast %49 : vector<32x1xf32> to vector<32x256xf32>
    %51 = arith.mulf %48, %50 : vector<32x256xf32>
    %52 = arith.addf %46, %51 : vector<32x256xf32>
    %cst_27 = arith.constant 0.000000e+00 : f32
    %53 = vector.broadcast %cst_27 : f32 to vector<32x256xf32>
    %54 = arith.select %22, %52, %53 : vector<32x256xi1>, vector<32x256xf32>
    %c0_28 = arith.constant 0 : index
    %c112 = arith.constant 112 : index
    %55 = vector.load %arg10[%c0_28, %c112] : memref<32x401xbf16, #tpu.memory_space<vmem>>, vector<32x256xbf16>
    %56 = arith.extf %55 : vector<32x256xbf16> to vector<32x256xf32>
    %57 = vector.extract_strided_slice %25 {offsets = [0, 1], sizes = [32, 1], strides = [1, 1]} : vector<32x9xf32> to vector<32x1xf32>
    %58 = vector.broadcast %57 : vector<32x1xf32> to vector<32x256xf32>
    %59 = arith.mulf %56, %58 : vector<32x256xf32>
    %c0_29 = arith.constant 0 : index
    %c128_30 = arith.constant 128 : index
    %60 = vector.load %arg10[%c0_29, %c128_30] : memref<32x401xbf16, #tpu.memory_space<vmem>>, vector<32x256xbf16>
    %61 = arith.extf %60 : vector<32x256xbf16> to vector<32x256xf32>
    %62 = vector.extract_strided_slice %25 {offsets = [0, 4], sizes = [32, 1], strides = [1, 1]} : vector<32x9xf32> to vector<32x1xf32>
    %63 = vector.broadcast %62 : vector<32x1xf32> to vector<32x256xf32>
    %64 = arith.mulf %61, %63 : vector<32x256xf32>
    %65 = arith.addf %59, %64 : vector<32x256xf32>
    %c0_31 = arith.constant 0 : index
    %c144 = arith.constant 144 : index
    %66 = vector.load %arg10[%c0_31, %c144] : memref<32x401xbf16, #tpu.memory_space<vmem>>, vector<32x256xbf16>
    %67 = arith.extf %66 : vector<32x256xbf16> to vector<32x256xf32>
    %68 = vector.extract_strided_slice %25 {offsets = [0, 7], sizes = [32, 1], strides = [1, 1]} : vector<32x9xf32> to vector<32x1xf32>
    %69 = vector.broadcast %68 : vector<32x1xf32> to vector<32x256xf32>
    %70 = arith.mulf %67, %69 : vector<32x256xf32>
    %71 = arith.addf %65, %70 : vector<32x256xf32>
    %72 = arith.addf %54, %71 : vector<32x256xf32>
    %c0_32 = arith.constant 0 : index
    %c113 = arith.constant 113 : index
    %73 = vector.load %arg10[%c0_32, %c113] : memref<32x401xbf16, #tpu.memory_space<vmem>>, vector<32x256xbf16>
    %74 = arith.extf %73 : vector<32x256xbf16> to vector<32x256xf32>
    %75 = vector.extract_strided_slice %25 {offsets = [0, 2], sizes = [32, 1], strides = [1, 1]} : vector<32x9xf32> to vector<32x1xf32>
    %76 = vector.broadcast %75 : vector<32x1xf32> to vector<32x256xf32>
    %77 = arith.mulf %74, %76 : vector<32x256xf32>
    %c0_33 = arith.constant 0 : index
    %c129 = arith.constant 129 : index
    %78 = vector.load %arg10[%c0_33, %c129] : memref<32x401xbf16, #tpu.memory_space<vmem>>, vector<32x256xbf16>
    %79 = arith.extf %78 : vector<32x256xbf16> to vector<32x256xf32>
    %80 = vector.extract_strided_slice %25 {offsets = [0, 5], sizes = [32, 1], strides = [1, 1]} : vector<32x9xf32> to vector<32x1xf32>
    %81 = vector.broadcast %80 : vector<32x1xf32> to vector<32x256xf32>
    %82 = arith.mulf %79, %81 : vector<32x256xf32>
    %83 = arith.addf %77, %82 : vector<32x256xf32>
    %c0_34 = arith.constant 0 : index
    %c145 = arith.constant 145 : index
    %84 = vector.load %arg10[%c0_34, %c145] : memref<32x401xbf16, #tpu.memory_space<vmem>>, vector<32x256xbf16>
    %85 = arith.extf %84 : vector<32x256xbf16> to vector<32x256xf32>
    %86 = vector.extract_strided_slice %25 {offsets = [0, 8], sizes = [32, 1], strides = [1, 1]} : vector<32x9xf32> to vector<32x1xf32>
    %87 = vector.broadcast %86 : vector<32x1xf32> to vector<32x256xf32>
    %88 = arith.mulf %85, %87 : vector<32x256xf32>
    %89 = arith.addf %83, %88 : vector<32x256xf32>
    %cst_35 = arith.constant 0.000000e+00 : f32
    %90 = vector.broadcast %cst_35 : f32 to vector<32x256xf32>
    %91 = arith.select %24, %89, %90 : vector<32x256xi1>, vector<32x256xf32>
    %92 = arith.addf %72, %91 : vector<32x256xf32>
    %93 = vector.broadcast %26 : vector<32x1xf32> to vector<32x256xf32>
    %94 = arith.addf %92, %93 : vector<32x256xf32>
    %cst_36 = arith.constant 0.000000e+00 : f32
    %95 = vector.broadcast %cst_36 : f32 to vector<32x256xf32>
    %96 = arith.maximumf %94, %95 : vector<32x256xf32>
    %c0_37 = arith.constant 0 : index
    %c0_38 = arith.constant 0 : index
    %97 = vector.load %arg5[%c0_37, %c0_38] : memref<32x32xf32, #tpu.memory_space<vmem>>, vector<32x32xf32>
    %cst_39 = arith.constant dense<0.000000e+00> : vector<32x256xf32>
    %98 = tpu.matmul %97, %96, %cst_39 {dimension_numbers = #tpu.dot_dimension_numbers<[1], [0], [0], [1], [0, 0, 1, 1], [], []>} : vector<32x32xf32>, vector<32x256xf32>, vector<32x256xf32> -> vector<32x256xf32>
    %99 = vector.broadcast %27 : vector<32x1xf32> to vector<32x256xf32>
    %100 = arith.addf %98, %99 : vector<32x256xf32>
    %cst_40 = arith.constant 0.000000e+00 : f32
    %101 = vector.broadcast %cst_40 : f32 to vector<32x256xf32>
    %102 = arith.maximumf %100, %101 : vector<32x256xf32>
    %cst_41 = arith.constant dense<0.000000e+00> : vector<32xf32>
    %103 = vector.multi_reduction <add>, %102, %cst_41 [1] : vector<32x256xf32> to vector<32xf32>
    %104 = vector.shape_cast %103 : vector<32xf32> to vector<32x1xf32>
    %cst_42 = arith.constant 3.906250e-03 : f32
    %105 = vector.broadcast %cst_42 : f32 to vector<32x1xf32>
    %106 = arith.mulf %104, %105 : vector<32x1xf32>
    %107 = vector.broadcast %106 : vector<32x1xf32> to vector<32x2xf32>
    %108 = arith.mulf %28, %107 : vector<32x2xf32>
    %cst_43 = arith.constant dense<0.000000e+00> : vector<2xf32>
    %109 = vector.multi_reduction <add>, %108, %cst_43 [0] : vector<32x2xf32> to vector<2xf32>
    %110 = vector.shape_cast %109 : vector<2xf32> to vector<1x2xf32>
    %cst_44 = arith.constant 0.000000e+00 : f32
    %111 = vector.broadcast %cst_44 : f32 to vector<1x2xf32>
    %112 = arith.maximumf %110, %111 : vector<1x2xf32>
    %113 = vector.broadcast %112 : vector<1x2xf32> to vector<32x2xf32>
    %114 = arith.mulf %29, %113 : vector<32x2xf32>
    %cst_45 = arith.constant dense<0.000000e+00> : vector<32xf32>
    %115 = vector.multi_reduction <add>, %114, %cst_45 [1] : vector<32x2xf32> to vector<32xf32>
    %116 = vector.shape_cast %115 : vector<32xf32> to vector<32x1xf32>
    %cst_46 = arith.constant 0.000000e+00 : f32
    %117 = vector.broadcast %cst_46 : f32 to vector<32x1xf32>
    %118 = arith.subf %117, %116 : vector<32x1xf32>
    %119 = math.exp %118 : vector<32x1xf32>
    %cst_47 = arith.constant 1.000000e+00 : f32
    %120 = vector.broadcast %cst_47 : f32 to vector<32x1xf32>
    %121 = arith.addf %120, %119 : vector<32x1xf32>
    %cst_48 = arith.constant 1.000000e+00 : f32
    %122 = vector.broadcast %cst_48 : f32 to vector<32x1xf32>
    %123 = arith.divf %122, %121 : vector<32x1xf32>
    %124 = vector.broadcast %123 : vector<32x1xf32> to vector<32x256xf32>
    %125 = arith.mulf %102, %124 : vector<32x256xf32>
    %126 = arith.addf %125, %31 : vector<32x256xf32>
    %c0_49 = arith.constant 0 : index
    %c0_50 = arith.constant 0 : index
    %c0_51 = arith.constant 0 : index
    %127 = vector.load %arg9[%c0_49, %c0_50, %c0_51] : memref<1x32x256xf32, #tpu.memory_space<vmem>>, vector<1x32x256xf32>
    %128 = vector.shape_cast %127 : vector<1x32x256xf32> to vector<32x256xf32>
    %129 = vector.shape_cast %126 : vector<32x256xf32> to vector<1x32x256xf32>
    tpu.vector_store %arg9[%c0_49, %c0_50, %c0_51], %129 {strides = array<i32>} : memref<1x32x256xf32, #tpu.memory_space<vmem>>, vector<1x32x256xf32>,
    return
  }
  func.func @transform_0(%arg0: i32) -> (i32, i32, i32) {
    %c0_i32 = arith.constant 0 : i32
    %c0_i32_0 = arith.constant 0 : i32
    %c0_i32_1 = arith.constant 0 : i32
    return %arg0, %c0_i32, %c0_i32_0 : i32, i32, i32
  }
  func.func @transform_1(%arg0: i32) -> (i32, i32) {
    %c0_i32 = arith.constant 0 : i32
    %c0_i32_0 = arith.constant 0 : i32
    %c0_i32_1 = arith.constant 0 : i32
    return %c0_i32, %c0_i32_0 : i32, i32
  }
  func.func @transform_2(%arg0: i32) -> (i32, i32) {
    %c0_i32 = arith.constant 0 : i32
    %c0_i32_0 = arith.constant 0 : i32
    %c0_i32_1 = arith.constant 0 : i32
    return %c0_i32, %c0_i32_0 : i32, i32
  }
  func.func @transform_3(%arg0: i32) -> (i32, i32) {
    %c0_i32 = arith.constant 0 : i32
    %c0_i32_0 = arith.constant 0 : i32
    %c0_i32_1 = arith.constant 0 : i32
    return %c0_i32, %c0_i32_0 : i32, i32
  }
  func.func @transform_4(%arg0: i32) -> (i32, i32) {
    %c0_i32 = arith.constant 0 : i32
    %c0_i32_0 = arith.constant 0 : i32
    %c0_i32_1 = arith.constant 0 : i32
    return %c0_i32, %c0_i32_0 : i32, i32
  }
  func.func @transform_5(%arg0: i32) -> (i32, i32) {
    %c0_i32 = arith.constant 0 : i32
    %c0_i32_0 = arith.constant 0 : i32
    %c0_i32_1 = arith.constant 0 : i32
    return %c0_i32, %c0_i32_0 : i32, i32
  }
  func.func @transform_6(%arg0: i32) -> (i32, i32) {
    %c0_i32 = arith.constant 0 : i32
    %c0_i32_0 = arith.constant 0 : i32
    %c0_i32_1 = arith.constant 0 : i32
    return %c0_i32, %c0_i32_0 : i32, i32
  }
  func.func @transform_7(%arg0: i32) -> (i32, i32) {
    %c0_i32 = arith.constant 0 : i32
    %c0_i32_0 = arith.constant 0 : i32
    %c0_i32_1 = arith.constant 0 : i32
    return %c0_i32, %c0_i32_0 : i32, i32
  }
  func.func @transform_8(%arg0: i32) -> (i32, i32, i32) {
    %c0_i32 = arith.constant 0 : i32
    %c0_i32_0 = arith.constant 0 : i32
    %c0_i32_1 = arith.constant 0 : i32
    return %arg0, %c0_i32, %c0_i32_0 : i32, i32, i32
  }
}

</mosaic_0001>

<llo_original>
// kernel: fr_pdp_block_forward.1
$region0: #{fr_pdp_block_forward.1}
  #allocation0 [shape = 'u32[]', space=smem, size = 0x4, offset = 0x4, fixed_abs, tag = 'smem constant byte address 0x4 - core index']
  #allocation1 [shape = 'u32[144,128]{1,0:T(1,128)}', space=vmem, size = 0x12000, scoped, tag = 'internal scratch']
  #allocation2 [shape = 'bf16[32,401]{1,0:T(16,128)(2,1)}', space=vmem, size = 0x8000, scoped, tag = 'scratch operand']
  %s0 = inlined_call_operand.vmem [shape: f32[2,32,256], index: 0, kind: input, shape index: {}]
  %s1 = inlined_call_operand.vmem [shape: f32[32,32], index: 1, kind: input, shape index: {}]
  %s2 = inlined_call_operand.vmem [shape: f32[32,9], index: 2, kind: input, shape index: {}]
  %s3 = inlined_call_operand.vmem [shape: f32[32,1], index: 3, kind: input, shape index: {}]
  %s4 = inlined_call_operand.vmem [shape: f32[32,32], index: 4, kind: input, shape index: {}]
  %s5 = inlined_call_operand.vmem [shape: f32[32,1], index: 5, kind: input, shape index: {}]
  %s6 = inlined_call_operand.vmem [shape: f32[32,2], index: 6, kind: input, shape index: {}]
  %s7 = inlined_call_operand.vmem [shape: f32[32,2], index: 7, kind: input, shape index: {}]
  %s8 = inlined_call_operand.vmem [shape: f32[2,32,256], index: 8, kind: output, shape index: {}]
  %s9 = sld [smem:[#allocation0]]
  $region65: #{fr_pdp_block_forward.1} parent=0
    _
  %s11 = ssub.s32 1, %s9
  %s12 = scalar_select 0, %s11, %s9
  loop: start=0, step=1, limit=4
  $region2: #{fr_pdp_block_forward.1} parent=0 // loop_pre_header
    _
  $region3: #{fr_pdp_block_forward.1} parent=0 // loop_header
    %s14 = sphi 0, %s18
    %p15 = scmp.ge.s32.totalorder %s14, 4
    %s24 = sphi 0, %s26
    %s27 = sphi 0, %s24
    %s28 = sphi 0, %s27
    %s44 = sphi 0, %s28
    %s48 = sphi 0, %s48
    %s50 = sphi 0, %s48
    %s51 = sphi 0, %s50
    %s65 = sphi 0, %s51
    %s69 = sphi 0, %s69
    %s71 = sphi 0, %s69
    %s72 = sphi 0, %s71
    %s86 = sphi 0, %s72
    %s90 = sphi 0, %s90
    %s92 = sphi 0, %s90
    %s93 = sphi 0, %s92
    %s107 = sphi 0, %s93
    %s111 = sphi 0, %s111
    %s113 = sphi 0, %s111
    %s114 = sphi 0, %s113
    %s128 = sphi 0, %s114
    %s132 = sphi 0, %s132
    %s134 = sphi 0, %s132
    %s135 = sphi 0, %s134
    %s149 = sphi 0, %s135
    %s153 = sphi 0, %s153
    %s155 = sphi 0, %s153
    %s156 = sphi 0, %s155
    %s170 = sphi 0, %s156
    %s174 = sphi 0, %s174
    %s176 = sphi 0, %s174
    %s177 = sphi 0, %s176
    %s191 = sphi 0, %s177
    %s197 = sphi 0, %s199
    %s200 = sphi 0, %s197
    %s201 = sphi 0, %s200
    %s217 = sphi 0, %s201
  $region4: #{fr_pdp_block_forward.1} parent=0 // loop_header_branch
    %17 = sbr.rel (%p15) target = $region8
  $region5: #{fr_pdp_block_forward.1} parent=0 // loop_body
    %s19 = ssub.s32 %s14, 1
    %s20 = ssub.s32 %s14, 2
    %s21 = sadd.s32 %s14, 1
    %s22 = ssub.s32 %s14, %s21
    %p23 = scmp.eq.s32.totalorder %s22, 0
    %s25 = sadd.s32 %s24, 1
    %s26 = scalar_select %p23, %s24, %s25
    %p29 = pneg %p23
    %p30 = scmp.eq.s32.totalorder %s14, 1
    %p31 = por %p29, %p30
    %p32 = scmp.ne.s32.totalorder %s24, %s27
    %p33 = scmp.eq.s32.totalorder %s14, 0
    %p34 = por %p32, %p33
    %p35 = scmp.ne.s32.totalorder %s24, %s27
    %p36 = scmp.eq.s32.totalorder %s19, 1
    %p37 = por %p35, %p36
    %p38 = scmp.ne.s32.totalorder %s27, %s28
    %p39 = scmp.eq.s32.totalorder %s19, 0
    %p40 = por %p38, %p39
    %p41 = scmp.ne.s32.totalorder %s27, %s28
    %p42 = scmp.eq.s32.totalorder %s20, 1
    %p43 = por %p41, %p42
    %p45 = scmp.ne.s32.totalorder %s28, %s44
    %p46 = scmp.eq.s32.totalorder %s20, 0
    %p47 = por %p45, %p46
    %s49 = sadd.s32 %s48, 1
    %p52 = scmp.eq.s32.totalorder %s14, 1
    %p53 = scmp.ne.s32.totalorder %s48, %s50
    %p54 = scmp.eq.s32.totalorder %s14, 0
    %p55 = por %p53, %p54
    %p56 = scmp.ne.s32.totalorder %s48, %s50
    %p57 = scmp.eq.s32.totalorder %s19, 1
    %p58 = por %p56, %p57
    %p59 = scmp.ne.s32.totalorder %s50, %s51
    %p60 = scmp.eq.s32.totalorder %s19, 0
    %p61 = por %p59, %p60
    %p62 = scmp.ne.s32.totalorder %s50, %s51
    %p63 = scmp.eq.s32.totalorder %s20, 1
    %p64 = por %p62, %p63
    %p66 = scmp.ne.s32.totalorder %s51, %s65
    %p67 = scmp.eq.s32.totalorder %s20, 0
    %p68 = por %p66, %p67
    %s70 = sadd.s32 %s69, 1
    %p73 = scmp.eq.s32.totalorder %s14, 1
    %p74 = scmp.ne.s32.totalorder %s69, %s71
    %p75 = scmp.eq.s32.totalorder %s14, 0
    %p76 = por %p74, %p75
    %p77 = scmp.ne.s32.totalorder %s69, %s71
    %p78 = scmp.eq.s32.totalorder %s19, 1
    %p79 = por %p77, %p78
    %p80 = scmp.ne.s32.totalorder %s71, %s72
    %p81 = scmp.eq.s32.totalorder %s19, 0
    %p82 = por %p80, %p81
    %p83 = scmp.ne.s32.totalorder %s71, %s72
    %p84 = scmp.eq.s32.totalorder %s20, 1
    %p85 = por %p83, %p84
    %p87 = scmp.ne.s32.totalorder %s72, %s86
    %p88 = scmp.eq.s32.totalorder %s20, 0
    %p89 = por %p87, %p88
    %s91 = sadd.s32 %s90, 1
    %p94 = scmp.eq.s32.totalorder %s14, 1
    %p95 = scmp.ne.s32.totalorder %s90, %s92
    %p96 = scmp.eq.s32.totalorder %s14, 0
    %p97 = por %p95, %p96
    %p98 = scmp.ne.s32.totalorder %s90, %s92
    %p99 = scmp.eq.s32.totalorder %s19, 1
    %p100 = por %p98, %p99
    %p101 = scmp.ne.s32.totalorder %s92, %s93
    %p102 = scmp.eq.s32.totalorder %s19, 0
    %p103 = por %p101, %p102
    %p104 = scmp.ne.s32.totalorder %s92, %s93
    %p105 = scmp.eq.s32.totalorder %s20, 1
    %p106 = por %p104, %p105
    %p108 = scmp.ne.s32.totalorder %s93, %s107
    %p109 = scmp.eq.s32.totalorder %s20, 0
    %p110 = por %p108, %p109
    %s112 = sadd.s32 %s111, 1
    %p115 = scmp.eq.s32.totalorder %s14, 1
    %p116 = scmp.ne.s32.totalorder %s111, %s113
    %p117 = scmp.eq.s32.totalorder %s14, 0
    %p118 = por %p116, %p117
    %p119 = scmp.ne.s32.totalorder %s111, %s113
    %p120 = scmp.eq.s32.totalorder %s19, 1
    %p121 = por %p119, %p120
    %p122 = scmp.ne.s32.totalorder %s113, %s114
    %p123 = scmp.eq.s32.totalorder %s19, 0
    %p124 = por %p122, %p123
    %p125 = scmp.ne.s32.totalorder %s113, %s114
    %p126 = scmp.eq.s32.totalorder %s20, 1
    %p127 = por %p125, %p126
    %p129 = scmp.ne.s32.totalorder %s114, %s128
    %p130 = scmp.eq.s32.totalorder %s20, 0
    %p131 = por %p129, %p130
    %s133 = sadd.s32 %s132, 1
    %p136 = scmp.eq.s32.totalorder %s14, 1
    %p137 = scmp.ne.s32.totalorder %s132, %s134
    %p138 = scmp.eq.s32.totalorder %s14, 0
    %p139 = por %p137, %p138
    %p140 = scmp.ne.s32.totalorder %s132, %s134
    %p141 = scmp.eq.s32.totalorder %s19, 1
    %p142 = por %p140, %p141
    %p143 = scmp.ne.s32.totalorder %s134, %s135
    %p144 = scmp.eq.s32.totalorder %s19, 0
    %p145 = por %p143, %p144
    %p146 = scmp.ne.s32.totalorder %s134, %s135
    %p147 = scmp.eq.s32.totalorder %s20, 1
    %p148 = por %p146, %p147
    %p150 = scmp.ne.s32.totalorder %s135, %s149
    %p151 = scmp.eq.s32.totalorder %s20, 0
    %p152 = por %p150, %p151
    %s154 = sadd.s32 %s153, 1
    %p157 = scmp.eq.s32.totalorder %s14, 1
    %p158 = scmp.ne.s32.totalorder %s153, %s155
    %p159 = scmp.eq.s32.totalorder %s14, 0
    %p160 = por %p158, %p159
    %p161 = scmp.ne.s32.totalorder %s153, %s155
    %p162 = scmp.eq.s32.totalorder %s19, 1
    %p163 = por %p161, %p162
    %p164 = scmp.ne.s32.totalorder %s155, %s156
    %p165 = scmp.eq.s32.totalorder %s19, 0
    %p166 = por %p164, %p165
    %p167 = scmp.ne.s32.totalorder %s155, %s156
    %p168 = scmp.eq.s32.totalorder %s20, 1
    %p169 = por %p167, %p168
    %p171 = scmp.ne.s32.totalorder %s156, %s170
    %p172 = scmp.eq.s32.totalorder %s20, 0
    %p173 = por %p171, %p172
    %s175 = sadd.s32 %s174, 1
    %p178 = scmp.eq.s32.totalorder %s14, 1
    %p179 = scmp.ne.s32.totalorder %s174, %s176
    %p180 = scmp.eq.s32.totalorder %s14, 0
    %p181 = por %p179, %p180
    %p182 = scmp.ne.s32.totalorder %s174, %s176
    %p183 = scmp.eq.s32.totalorder %s19, 1
    %p184 = por %p182, %p183
    %p185 = scmp.ne.s32.totalorder %s176, %s177
    %p186 = scmp.eq.s32.totalorder %s19, 0
    %p187 = por %p185, %p186
    %p188 = scmp.ne.s32.totalorder %s176, %s177
    %p189 = scmp.eq.s32.totalorder %s20, 1
    %p190 = por %p188, %p189
    %p192 = scmp.ne.s32.totalorder %s177, %s191
    %p193 = scmp.eq.s32.totalorder %s20, 0
    %p194 = por %p192, %p193
    %s195 = ssub.s32 %s14, %s21
    %p196 = scmp.eq.s32.totalorder %s195, 0
    %s198 = sadd.s32 %s197, 1
    %s199 = scalar_select %p196, %s197, %s198
    %p202 = pneg %p196
    %p203 = scmp.eq.s32.totalorder %s14, 1
    %p204 = por %p202, %p203
    %p205 = scmp.ne.s32.totalorder %s197, %s200
    %p206 = scmp.eq.s32.totalorder %s14, 0
    %p207 = por %p205, %p206
    %p208 = scmp.ne.s32.totalorder %s197, %s200
    %p209 = scmp.eq.s32.totalorder %s19, 1
    %p210 = por %p208, %p209
    %p211 = scmp.ne.s32.totalorder %s200, %s201
    %p212 = scmp.eq.s32.totalorder %s19, 0
    %p213 = por %p211, %p212
    %p214 = scmp.ne.s32.totalorder %s200, %s201
    %p215 = scmp.eq.s32.totalorder %s20, 1
    %p216 = por %p214, %p215
    %p218 = scmp.ne.s32.totalorder %s201, %s217
    %p219 = scmp.eq.s32.totalorder %s20, 0
    %p220 = por %p218, %p219
    %p221 = scmp.le.s32.totalorder 1, %s14
    %p222 = scmp.lt.s32.totalorder %s14, 3
    %p223 = pnand %p221, %p222
    %p224 = pneg %p223
    // Predicated region
    $region9: #{fr_pdp_block_forward.1} parent=5 // pred_check
      _
    $region10: #{fr_pdp_block_forward.1} parent=5 // pred_check_branch
      %226 = sbr.rel (%p223) target = $region12
    $region11: #{fr_pdp_block_forward.1} parent=5 // pred_region
      %s227 = ssub.s32 %s14, 1
      // Predicated region
      $region13: #{fr_pdp_block_forward.1} parent=11 // pred_check
        %p228 = pneg %p61
      $region14: #{fr_pdp_block_forward.1} parent=11 // pred_check_branch
        %230 = sbr.rel (%p228) target = $region16
      $region15: #{fr_pdp_block_forward.1} parent=11 // pred_region
        _
      $region16: #{fr_pdp_block_forward.1} parent=11 // pred_fallthru
        _
      // Predicated region
      $region17: #{fr_pdp_block_forward.1} parent=11 // pred_check
        %p231 = pneg %p82
      $region18: #{fr_pdp_block_forward.1} parent=11 // pred_check_branch
        %233 = sbr.rel (%p231) target = $region20
      $region19: #{fr_pdp_block_forward.1} parent=11 // pred_region
        _
      $region20: #{fr_pdp_block_forward.1} parent=11 // pred_fallthru
        _
      // Predicated region
      $region21: #{fr_pdp_block_forward.1} parent=11 // pred_check
        %p234 = pneg %p103
      $region22: #{fr_pdp_block_forward.1} parent=11 // pred_check_branch
        %236 = sbr.rel (%p234) target = $region24
      $region23: #{fr_pdp_block_forward.1} parent=11 // pred_region
        _
      $region24: #{fr_pdp_block_forward.1} parent=11 // pred_fallthru
        _
      // Predicated region
      $region25: #{fr_pdp_block_forward.1} parent=11 // pred_check
        %p237 = pneg %p124
      $region26: #{fr_pdp_block_forward.1} parent=11 // pred_check_branch
        %239 = sbr.rel (%p237) target = $region28
      $region27: #{fr_pdp_block_forward.1} parent=11 // pred_region
        _
      $region28: #{fr_pdp_block_forward.1} parent=11 // pred_fallthru
        _
      // Predicated region
      $region29: #{fr_pdp_block_forward.1} parent=11 // pred_check
        %p240 = pneg %p145
      $region30: #{fr_pdp_block_forward.1} parent=11 // pred_check_branch
        %242 = sbr.rel (%p240) target = $region32
      $region31: #{fr_pdp_block_forward.1} parent=11 // pred_region
        _
      $region32: #{fr_pdp_block_forward.1} parent=11 // pred_fallthru
        _
      // Predicated region
      $region33: #{fr_pdp_block_forward.1} parent=11 // pred_check
        %p243 = pneg %p166
      $region34: #{fr_pdp_block_forward.1} parent=11 // pred_check_branch
        %245 = sbr.rel (%p243) target = $region36
      $region35: #{fr_pdp_block_forward.1} parent=11 // pred_region
        _
      $region36: #{fr_pdp_block_forward.1} parent=11 // pred_fallthru
        _
      // Predicated region
      $region37: #{fr_pdp_block_forward.1} parent=11 // pred_check
        %p246 = pneg %p187
      $region38: #{fr_pdp_block_forward.1} parent=11 // pred_check_branch
        %248 = sbr.rel (%p246) target = $region40
      $region39: #{fr_pdp_block_forward.1} parent=11 // pred_region
        _
      $region40: #{fr_pdp_block_forward.1} parent=11 // pred_fallthru
        _
    $region12: #{fr_pdp_block_forward.1} parent=5 // pred_fallthru
      _
    %p249 = scmp.lt.s32.totalorder %s14, 2
    // Predicated region
    $region41: #{fr_pdp_block_forward.1} parent=5 // pred_check
      %p250 = pneg %p249
    $region42: #{fr_pdp_block_forward.1} parent=5 // pred_check_branch
      %252 = sbr.rel (%p250) target = $region44
    $region43: #{fr_pdp_block_forward.1} parent=5 // pred_region
      // Predicated region
      $region45: #{fr_pdp_block_forward.1} parent=43 // pred_check
        %p253 = pneg %p34
      $region46: #{fr_pdp_block_forward.1} parent=43 // pred_check_branch
        %255 = sbr.rel (%p253) target = $region48
      $region47: #{fr_pdp_block_forward.1} parent=43 // pred_region
        %p256 = scmp.lt.s32.totalorder %s14, 1
        %s257 = scalar_select %p256, %s14, 1
        %s258 = smul.addr %s257, 8
        %s259 = smul.addr %s258, 8
        %s260 = scalar_lea.vmem %s0, %s259
      $region48: #{fr_pdp_block_forward.1} parent=43 // pred_fallthru
        _
    $region44: #{fr_pdp_block_forward.1} parent=5 // pred_fallthru
      _
    %p261 = scmp.le.s32.totalorder 1, %s14
    %p262 = scmp.lt.s32.totalorder %s14, 3
    %p263 = pnand %p261, %p262
    %p264 = pneg %p263
    // Predicated region
    $region49: #{fr_pdp_block_forward.1} parent=5 // pred_check
      _
    $region50: #{fr_pdp_block_forward.1} parent=5 // pred_check_branch
      %266 = sbr.rel (%p263) target = $region52
    $region51: #{fr_pdp_block_forward.1} parent=5 // pred_region
      %s267 = ssub.s32 %s14, 1
      %p268 = scmp.lt.s32.totalorder %s19, 1
      %s269 = scalar_select %p268, %s19, 1
      %s270 = smul.addr %s269, 8
      %s271 = smul.addr %s270, 8
      %s272 = scalar_lea.vmem %s0, %s271
      %p273 = pneg %p40
      %p274 = pneg %p37
      %p275 = pneg %p61
      %p276 = pneg %p58
      %p277 = pneg %p82
      %p278 = pneg %p79
      %p279 = pneg %p103
      %p280 = pneg %p100
      %p281 = pneg %p124
      %p282 = pneg %p121
      %p283 = pneg %p145
      %p284 = pneg %p142
      %p285 = pneg %p166
      %p286 = pneg %p163
      %p287 = pneg %p187
      %p288 = pneg %p184
      %p289 = pneg %p213
      %p290 = pneg %p210
      %p291 = scmp.lt.s32.totalorder %s19, 1
      %s292 = scalar_select %p291, %s19, 1
      %s293 = smul.addr %s292, 8
      %s294 = smul.addr %s293, 8
      %s295 = scalar_lea.vmem %s8, %s294
      %p296 = scmp.lt.s32.totalorder %s19, 1
      %s297 = scalar_select %p296, %s19, 1
      %s298 = smul.addr %s297, 8
      %s299 = smul.addr %s298, 8
      %s300 = scalar_lea.vmem %s0, %s299
      %p301 = scmp.lt.s32.totalorder %s19, 1
      %s302 = scalar_select %p301, %s19, 1
      %s303 = smul.addr %s302, 8
      %s304 = smul.addr %s303, 8
      %s305 = scalar_lea.vmem %s8, %s304
      %307 = vst [vmem:[#allocation2] sm:$0xff] 0
      %308 = vst [vmem:[#allocation2 + $0x20] sm:$0xff] 0
      %vm309 = vcmask 138240
      %310 = vst.msk [vmem:[#allocation2 + $0x18] sm:$0xff] %vm309, 0
      %311 = vst.msk [vmem:[#allocation2 + $0x38] sm:$0xff] %vm309, 0
      %v312 = vlaneseq
      %v313 = vand.u32 %v312, 127
      %v314 = vadd.s32 %v313, 128
      %vm315 = vcmp.lt.s32.totalorder %v313, 0
      %v316 = vsub.s32 0, %v313
      %v317 = vsel %vm315, %v316, %v313
      %v318 = vshrl.u32 %v317, 4
      %v319 = vand.u32 %v317, 15
      %v320 = vsub.s32 0, %v319
      %v321 = vsel %vm315, %v320, %v319
      %vm322 = vcmp.lt.s32.totalorder %v314, 0
      %v323 = vsub.s32 0, %v314
      %v324 = vsel %vm322, %v323, %v314
      %v325 = vshrl.u32 %v324, 4
      %v326 = vand.u32 %v324, 15
      %v327 = vsub.s32 0, %v326
      %v328 = vsel %vm322, %v327, %v326
      %vm329 = vcmp.ne.s32.totalorder %v321, 0
      %vm330 = vcmp.ne.s32.totalorder %v328, 0
      %vm331 = vcmp.lt.s32.totalorder %v321, 0
      %vm332 = vcmp.lt.s32.totalorder %v328, 0
      %vm333 = vmand %vm331, %vm329
      %vm334 = vmand %vm332, %vm330
      %v335 = vadd.s32 %v321, 16
      %v336 = vadd.s32 %v328, 16
      %v337 = vsel %vm333, %v335, %v321
      %v338 = vsel %vm334, %v336, %v328
      %vm339 = vcmp.ge.s32.totalorder %v337, 1
      %vm340 = vcmp.ge.s32.totalorder %v338, 1
      %vm341 = vcmp.le.s32.totalorder %v337, 14
      %vm342 = vcmp.le.s32.totalorder %v338, 14
      %v343 = vld [vmem:[%s2] sm:$0xff]
      %v344 = vld [vmem:[%s2 + $0x8] sm:$0xff]
      %v345 = vld [vmem:[%s2 + $0x10] sm:$0xff]
      %v346 = vld [vmem:[%s2 + $0x18] sm:$0xff]
      %v347 = vld [vmem:[%s3] sm:$0xff]
      %v348 = vld [vmem:[%s3 + $0x8] sm:$0xff]
      %v349 = vld [vmem:[%s3 + $0x10] sm:$0xff]
      %v350 = vld [vmem:[%s3 + $0x18] sm:$0xff]
      %v351 = vld [vmem:[%s5] sm:$0xff]
      %v352 = vld [vmem:[%s5 + $0x8] sm:$0xff]
      %v353 = vld [vmem:[%s5 + $0x10] sm:$0xff]
      %v354 = vld [vmem:[%s5 + $0x18] sm:$0xff]
      %v355 = vld [vmem:[%s6] sm:$0xff]
      %v356 = vld [vmem:[%s6 + $0x8] sm:$0xff]
      %v357 = vld [vmem:[%s6 + $0x10] sm:$0xff]
      %v358 = vld [vmem:[%s6 + $0x18] sm:$0xff]
      %v359 = vld [vmem:[%s7] sm:$0xff]
      %v360 = vld [vmem:[%s7 + $0x8] sm:$0xff]
      %v361 = vld [vmem:[%s7 + $0x10] sm:$0xff]
      %v362 = vld [vmem:[%s7 + $0x18] sm:$0xff]
      %v363 = vld [vmem:[%s300] sm:$0xff]
      %v364 = vld [vmem:[%s300 + $0x8] sm:$0xff]
      %v365 = vld [vmem:[%s300 + $0x10] sm:$0xff]
      %v366 = vld [vmem:[%s300 + $0x18] sm:$0xff]
      %v367 = vld [vmem:[%s300 + $0x20] sm:$0xff]
      %v368 = vld [vmem:[%s300 + $0x28] sm:$0xff]
      %v369 = vld [vmem:[%s300 + $0x30] sm:$0xff]
      %v370 = vld [vmem:[%s300 + $0x38] sm:$0xff]
      %v371 = vld [vmem:[%s1] sm:$0xff]
      %v372 = vld [vmem:[%s1 + $0x8] sm:$0xff]
      %v373 = vld [vmem:[%s1 + $0x10] sm:$0xff]
      %v374 = vld [vmem:[%s1 + $0x18] sm:$0xff]
      %vm375 = vcmask 261120
      %v377 = vsel %vm375, %v371, 0
      %v380 = vsel %vm375, %v372, 0
      %v383 = vsel %vm375, %v373, 0
      %v386 = vsel %vm375, %v374, 0
      %388 = vmatprep.subr.mxu0 %v364
      %389 = vmatpush1.msra.mxu0 %v363
      %390 = vmatprep.subr.mxu0 %v366
      %391 = vmatpush1.msra.mxu0 %v365
      %392 = vmatprep.subr.mxu0 %v368
      %393 = vmatpush1.msra.mxu0 %v367
      %394 = vmatprep.subr.mxu0 %v370
      %395 = vmatpush1.msra.mxu0 %v369
      %396 = vmatprep.subr.mxu0 0.0
      %397 = vmatpush1.msra.mxu0 0.0
      %398 = vmatprep.subr.mxu0 0.0
      %399 = vmatpush1.msra.mxu0 0.0
      %400 = vmatprep.subr.mxu0 0.0
      %401 = vmatpush1.msra.mxu0 0.0
      %402 = vmatprep.subr.mxu0 0.0
      %403 = vmatpush1.msra.mxu0 0.0
      %404 = vmatprep.subr.mxu0 0.0
      %405 = vmatpush1.msra.mxu0 0.0
      %406 = vmatprep.subr.mxu0 0.0
      %407 = vmatpush1.msra.mxu0 0.0
      %408 = vmatprep.subr.mxu0 0.0
      %409 = vmatpush1.msra.mxu0 0.0
      %410 = vmatprep.subr.mxu0 0.0
      %411 = vmatpush1.msra.mxu0 0.0
      %412 = vmatprep.subr.mxu0 0.0
      %413 = vmatpush1.msra.mxu0 0.0
      %414 = vmatprep.subr.mxu0 0.0
      %415 = vmatpush1.msra.mxu0 0.0
      %416 = vmatprep.subr.mxu0 0.0
      %417 = vmatpush1.msra.mxu0 0.0
      %418 = vmatprep.subr.mxu0 0.0
      %419 = vmatpush1.msra.mxu0 0.0
      %420 = vmatprep.subr.mxu0 0.0
      %421 = vmatpush1.msra.mxu0 0.0
      %422 = vmatprep.subr.mxu0 0.0
      %423 = vmatpush1.msra.mxu0 0.0
      %424 = vmatprep.subr.mxu0 0.0
      %425 = vmatpush1.msra.mxu0 0.0
      %426 = vmatprep.subr.mxu0 0.0
      %427 = vmatpush1.msra.mxu0 0.0
      %428 = vmatprep.subr.mxu0 0.0
      %429 = vmatpush1.msra.mxu0 0.0
      %430 = vmatprep.subr.mxu0 0.0
      %431 = vmatpush1.msra.mxu0 0.0
      %432 = vmatprep.subr.mxu0 0.0
      %433 = vmatpush1.msra.mxu0 0.0
      %434 = vmatprep.subr.mxu0 0.0
      %435 = vmatpush1.msra.mxu0 0.0
      %436 = vmatprep.subr.mxu0 0.0
      %437 = vmatpush1.msra.mxu0 0.0
      %438 = vmatprep.subr.mxu0 0.0
      %439 = vmatpush1.msra.mxu0 0.0
      %440 = vmatprep.subr.mxu0 0.0
      %441 = vmatpush1.msra.mxu0 0.0
      %442 = vmatprep.subr.mxu0 0.0
      %443 = vmatpush1.msra.mxu0 0.0
      %444 = vmatprep.subr.mxu0 0.0
      %445 = vmatpush1.msra.mxu0 0.0
      %446 = vmatprep.subr.mxu0 0.0
      %447 = vmatpush1.msra.mxu0 0.0
      %448 = vmatprep.subr.mxu0 0.0
      %449 = vmatpush1.msra.mxu0 0.0
      %450 = vmatprep.subr.mxu0 0.0
      %451 = vmatpush1.msra.mxu0 0.0
      %452 = vmatprep.mubr.f32.mxu0 0.0
      %453 = vmatmul.mubr.f32.gmra.mrb[0].mxu0 %v377
      %v454 = vpop.f32.mrb[0].mxu0
      %v455 = vadd.f32 0.0, %v454
      %v456 = vpop.f32.mrb[0].mxu0
      %v457 = vadd.f32 0.0, %v456
      %458 = vmatprep.mubr.f32.mxu0 0.0
      %459 = vmatmul.mubr.f32.gmra.mrb[0].mxu0 %v380
      %v460 = vpop.f32.mrb[0].mxu0
      %v461 = vadd.f32 0.0, %v460
      %v462 = vpop.f32.mrb[0].mxu0
      %v463 = vadd.f32 0.0, %v462
      %464 = vmatprep.mubr.f32.mxu0 0.0
      %465 = vmatmul.mubr.f32.gmra.mrb[0].mxu0 %v383
      %v466 = vpop.f32.mrb[0].mxu0
      %v467 = vadd.f32 0.0, %v466
      %v468 = vpop.f32.mrb[0].mxu0
      %v469 = vadd.f32 0.0, %v468
      %470 = vmatprep.mubr.f32.mxu0 0.0
      %471 = vmatmul.mubr.f32.gmra.mrb[0].mxu0 %v386
      %v472 = vpop.f32.mrb[0].mxu0
      %v473 = vadd.f32 0.0, %v472
      %v474 = vpop.f32.mrb[0].mxu0
      %v475 = vadd.f32 0.0, %v474
      %476 = vdwg.mxu0
      %v477 = vpack.c.bf16 %v461, %v455
      %v478 = vpack.c.bf16 %v463, %v457
      %v479 = vpack.c.bf16 %v473, %v467
      %v480 = vpack.c.bf16 %v475, %v469
      %481 = vst [vmem:[#allocation2 + $0x8] sm:$0xff] %v477
      %482 = vst [vmem:[#allocation2 + $0x10] sm:$0xff] %v478
      %483 = vst [vmem:[#allocation2 + $0x28] sm:$0xff] %v479
      %484 = vst [vmem:[#allocation2 + $0x30] sm:$0xff] %v480
      %v485 = vld [vmem:[#allocation2] sm:$0xff]
      %v486 = vld [vmem:[#allocation2 + $0x8] sm:$0xff]
      %v487 = vld [vmem:[#allocation2 + $0x10] sm:$0xff]
      %v488 = vld [vmem:[#allocation2 + $0x20] sm:$0xff]
      %v489 = vld [vmem:[#allocation2 + $0x28] sm:$0xff]
      %v490 = vld [vmem:[#allocation2 + $0x30] sm:$0xff]
      %v491 = vunpack.c.l.bf16 %v485
      %v492 = vunpack.c.l.bf16 %v486
      %v493 = vunpack.c.l.bf16 %v487
      %v494 = vunpack.c.h.bf16 %v485
      %v495 = vunpack.c.h.bf16 %v486
      %v496 = vunpack.c.h.bf16 %v487
      %v497 = vunpack.c.l.bf16 %v488
      %v498 = vunpack.c.l.bf16 %v489
      %v499 = vunpack.c.l.bf16 %v490
      %v500 = vunpack.c.h.bf16 %v488
      %v501 = vunpack.c.h.bf16 %v489
      %v502 = vunpack.c.h.bf16 %v490
      %504 = vset.pattern.permute.xlu0 0
      %505 = vperm.xlu0 %504, %v343
      %v506 = vpop.permute.xlu0 %505
      %509 = vset.pattern.permute.xlu0 0
      %510 = vperm.xlu0 %509, %v344
      %v511 = vpop.permute.xlu0 %510
      %514 = vset.pattern.permute.xlu0 0
      %515 = vperm.xlu0 %514, %v345
      %v516 = vpop.permute.xlu0 %515
      %519 = vset.pattern.permute.xlu0 0
      %520 = vperm.xlu0 %519, %v346
      %v521 = vpop.permute.xlu0 %520
      %v523 = vmul.f32 %v491, %v506
      %v524 = vmul.f32 %v492, %v506
      %v525 = vmul.f32 %v493, %v506
      %v526 = vmul.f32 %v494, %v511
      %v527 = vmul.f32 %v495, %v511
      %v528 = vmul.f32 %v496, %v511
      %v529 = vmul.f32 %v497, %v516
      %v530 = vmul.f32 %v498, %v516
      %v531 = vmul.f32 %v499, %v516
      %v532 = vmul.f32 %v500, %v521
      %v533 = vmul.f32 %v501, %v521
      %v534 = vmul.f32 %v502, %v521
      %535 = vset.pattern.permute.xlu0 3
      %536 = vperm.xlu0 %535, %v343
      %v537 = vpop.permute.xlu0 %536
      %539 = vset.pattern.permute.xlu0 3
      %540 = vperm.xlu0 %539, %v344
      %v541 = vpop.permute.xlu0 %540
      %543 = vset.pattern.permute.xlu0 3
      %544 = vperm.xlu0 %543, %v345
      %v545 = vpop.permute.xlu0 %544
      %547 = vset.pattern.permute.xlu0 3
      %548 = vperm.xlu0 %547, %v346
      %v549 = vpop.permute.xlu0 %548
      %v551 = vmul.f32 %v491, %v537
      %v552 = vmul.f32 %v492, %v537
      %v553 = vmul.f32 %v493, %v537
      %v554 = vmul.f32 %v494, %v541
      %v555 = vmul.f32 %v495, %v541
      %v556 = vmul.f32 %v496, %v541
      %v557 = vmul.f32 %v497, %v545
      %v558 = vmul.f32 %v498, %v545
      %v559 = vmul.f32 %v499, %v545
      %v560 = vmul.f32 %v500, %v549
      %v561 = vmul.f32 %v501, %v549
      %v562 = vmul.f32 %v502, %v549
      %575 = vrot.lane.b32.xlu0 %v551, 112
      %v576 = vpop.permute.xlu0 %575
      %577 = vrot.lane.b32.xlu0 %v552, 112
      %v578 = vpop.permute.xlu0 %577
      %579 = vrot.lane.b32.xlu0 %v553, 112
      %v580 = vpop.permute.xlu0 %579
      %581 = vrot.lane.b32.xlu0 %v554, 112
      %v582 = vpop.permute.xlu0 %581
      %583 = vrot.lane.b32.xlu0 %v555, 112
      %v584 = vpop.permute.xlu0 %583
      %585 = vrot.lane.b32.xlu0 %v556, 112
      %v586 = vpop.permute.xlu0 %585
      %587 = vrot.lane.b32.xlu0 %v557, 112
      %v588 = vpop.permute.xlu0 %587
      %589 = vrot.lane.b32.xlu0 %v558, 112
      %v590 = vpop.permute.xlu0 %589
      %591 = vrot.lane.b32.xlu0 %v559, 112
      %v592 = vpop.permute.xlu0 %591
      %593 = vrot.lane.b32.xlu0 %v560, 112
      %v594 = vpop.permute.xlu0 %593
      %595 = vrot.lane.b32.xlu0 %v561, 112
      %v596 = vpop.permute.xlu0 %595
      %597 = vrot.lane.b32.xlu0 %v562, 112
      %v598 = vpop.permute.xlu0 %597
      %vm599 = vcmask 916480
      %v600 = vsel %vm599, %v576, %v578
      %v601 = vsel %vm599, %v578, %v580
      %v602 = vsel %vm599, %v582, %v584
      %v603 = vsel %vm599, %v584, %v586
      %v604 = vsel %vm599, %v588, %v590
      %v605 = vsel %vm599, %v590, %v592
      %v606 = vsel %vm599, %v594, %v596
      %v607 = vsel %vm599, %v596, %v598
      %v620 = vadd.f32 %v523, %v600
      %v621 = vadd.f32 %v524, %v601
      %v622 = vadd.f32 %v525, %v580
      %v623 = vadd.f32 %v526, %v602
      %v624 = vadd.f32 %v527, %v603
      %v625 = vadd.f32 %v528, %v586
      %v626 = vadd.f32 %v529, %v604
      %v627 = vadd.f32 %v530, %v605
      %v628 = vadd.f32 %v531, %v592
      %v629 = vadd.f32 %v532, %v606
      %v630 = vadd.f32 %v533, %v607
      %v631 = vadd.f32 %v534, %v598
      %v632 = vld [vmem:[#allocation2 + $0x8] sm:$0xff]
      %v633 = vld [vmem:[#allocation2 + $0x10] sm:$0xff]
      %v634 = vld [vmem:[#allocation2 + $0x18] sm:$0xff]
      %v635 = vld [vmem:[#allocation2 + $0x28] sm:$0xff]
      %v636 = vld [vmem:[#allocation2 + $0x30] sm:$0xff]
      %v637 = vld [vmem:[#allocation2 + $0x38] sm:$0xff]
      %v638 = vunpack.c.l.bf16 %v632
      %v639 = vunpack.c.l.bf16 %v633
      %v640 = vunpack.c.l.bf16 %v634
      %v641 = vunpack.c.h.bf16 %v632
      %v642 = vunpack.c.h.bf16 %v633
      %v643 = vunpack.c.h.bf16 %v634
      %v644 = vunpack.c.l.bf16 %v635
      %v645 = vunpack.c.l.bf16 %v636
      %v646 = vunpack.c.l.bf16 %v637
      %v647 = vunpack.c.h.bf16 %v635
      %v648 = vunpack.c.h.bf16 %v636
      %v649 = vunpack.c.h.bf16 %v637
      %650 = vset.pattern.permute.xlu0 6
      %651 = vperm.xlu0 %650, %v343
      %v652 = vpop.permute.xlu0 %651
      %654 = vset.pattern.permute.xlu0 6
      %655 = vperm.xlu0 %654, %v344
      %v656 = vpop.permute.xlu0 %655
      %658 = vset.pattern.permute.xlu0 6
      %659 = vperm.xlu0 %658, %v345
      %v660 = vpop.permute.xlu0 %659
      %662 = vset.pattern.permute.xlu0 6
      %663 = vperm.xlu0 %662, %v346
      %v664 = vpop.permute.xlu0 %663
      %v666 = vmul.f32 %v638, %v652
      %v667 = vmul.f32 %v639, %v652
      %v668 = vmul.f32 %v640, %v652
      %v669 = vmul.f32 %v641, %v656
      %v670 = vmul.f32 %v642, %v656
      %v671 = vmul.f32 %v643, %v656
      %v672 = vmul.f32 %v644, %v660
      %v673 = vmul.f32 %v645, %v660
      %v674 = vmul.f32 %v646, %v660
      %v675 = vmul.f32 %v647, %v664
      %v676 = vmul.f32 %v648, %v664
      %v677 = vmul.f32 %v649, %v664
      %690 = vrot.lane.b32.xlu0 %v666, 96
      %v691 = vpop.permute.xlu0 %690
      %692 = vrot.lane.b32.xlu0 %v667, 96
      %v693 = vpop.permute.xlu0 %692
      %694 = vrot.lane.b32.xlu0 %v668, 96
      %v695 = vpop.permute.xlu0 %694
      %696 = vrot.lane.b32.xlu0 %v669, 96
      %v697 = vpop.permute.xlu0 %696
      %698 = vrot.lane.b32.xlu0 %v670, 96
      %v699 = vpop.permute.xlu0 %698
      %700 = vrot.lane.b32.xlu0 %v671, 96
      %v701 = vpop.permute.xlu0 %700
      %702 = vrot.lane.b32.xlu0 %v672, 96
      %v703 = vpop.permute.xlu0 %702
      %704 = vrot.lane.b32.xlu0 %v673, 96
      %v705 = vpop.permute.xlu0 %704
      %706 = vrot.lane.b32.xlu0 %v674, 96
      %v707 = vpop.permute.xlu0 %706
      %708 = vrot.lane.b32.xlu0 %v675, 96
      %v709 = vpop.permute.xlu0 %708
      %710 = vrot.lane.b32.xlu0 %v676, 96
      %v711 = vpop.permute.xlu0 %710
      %712 = vrot.lane.b32.xlu0 %v677, 96
      %v713 = vpop.permute.xlu0 %712
      %vm714 = vcmask 785408
      %v715 = vsel %vm714, %v691, %v693
      %v716 = vsel %vm714, %v693, %v695
      %v717 = vsel %vm714, %v697, %v699
      %v718 = vsel %vm714, %v699, %v701
      %v719 = vsel %vm714, %v703, %v705
      %v720 = vsel %vm714, %v705, %v707
      %v721 = vsel %vm714, %v709, %v711
      %v722 = vsel %vm714, %v711, %v713
      %v735 = vadd.f32 %v620, %v691
      %v736 = vadd.f32 %v621, %v715
      %v737 = vadd.f32 %v622, %v716
      %v738 = vadd.f32 %v623, %v697
      %v739 = vadd.f32 %v624, %v717
      %v740 = vadd.f32 %v625, %v718
      %v741 = vadd.f32 %v626, %v703
      %v742 = vadd.f32 %v627, %v719
      %v743 = vadd.f32 %v628, %v720
      %v744 = vadd.f32 %v629, %v709
      %v745 = vadd.f32 %v630, %v721
      %v746 = vadd.f32 %v631, %v722
      %759 = vrot.lane.b32.xlu0 %v735, 17
      %v760 = vpop.permute.xlu0 %759
      %761 = vrot.lane.b32.xlu0 %v736, 17
      %v762 = vpop.permute.xlu0 %761
      %763 = vrot.lane.b32.xlu0 %v737, 17
      %v764 = vpop.permute.xlu0 %763
      %765 = vrot.lane.b32.xlu0 %v738, 17
      %v766 = vpop.permute.xlu0 %765
      %767 = vrot.lane.b32.xlu0 %v739, 17
      %v768 = vpop.permute.xlu0 %767
      %769 = vrot.lane.b32.xlu0 %v740, 17
      %v770 = vpop.permute.xlu0 %769
      %771 = vrot.lane.b32.xlu0 %v741, 17
      %v772 = vpop.permute.xlu0 %771
      %773 = vrot.lane.b32.xlu0 %v742, 17
      %v774 = vpop.permute.xlu0 %773
      %775 = vrot.lane.b32.xlu0 %v743, 17
      %v776 = vpop.permute.xlu0 %775
      %777 = vrot.lane.b32.xlu0 %v744, 17
      %v778 = vpop.permute.xlu0 %777
      %779 = vrot.lane.b32.xlu0 %v745, 17
      %v780 = vpop.permute.xlu0 %779
      %781 = vrot.lane.b32.xlu0 %v746, 17
      %v782 = vpop.permute.xlu0 %781
      %v783 = vsel %vm309, %v760, %v762
      %v784 = vsel %vm309, %v762, %v764
      %v785 = vsel %vm309, %v766, %v768
      %v786 = vsel %vm309, %v768, %v770
      %v787 = vsel %vm309, %v772, %v774
      %v788 = vsel %vm309, %v774, %v776
      %v789 = vsel %vm309, %v778, %v780
      %v790 = vsel %vm309, %v780, %v782
      %v799 = vsel %vm339, %v783, 0.0
      %v800 = vsel %vm340, %v784, 0.0
      %v801 = vsel %vm339, %v785, 0.0
      %v802 = vsel %vm340, %v786, 0.0
      %v803 = vsel %vm339, %v787, 0.0
      %v804 = vsel %vm340, %v788, 0.0
      %v805 = vsel %vm339, %v789, 0.0
      %v806 = vsel %vm340, %v790, 0.0
      %807 = vset.pattern.permute.xlu0 1
      %808 = vperm.xlu0 %807, %v343
      %v809 = vpop.permute.xlu0 %808
      %811 = vset.pattern.permute.xlu0 1
      %812 = vperm.xlu0 %811, %v344
      %v813 = vpop.permute.xlu0 %812
      %815 = vset.pattern.permute.xlu0 1
      %816 = vperm.xlu0 %815, %v345
      %v817 = vpop.permute.xlu0 %816
      %819 = vset.pattern.permute.xlu0 1
      %820 = vperm.xlu0 %819, %v346
      %v821 = vpop.permute.xlu0 %820
      %v823 = vmul.f32 %v491, %v809
      %v824 = vmul.f32 %v492, %v809
      %v825 = vmul.f32 %v493, %v809
      %v826 = vmul.f32 %v494, %v813
      %v827 = vmul.f32 %v495, %v813
      %v828 = vmul.f32 %v496, %v813
      %v829 = vmul.f32 %v497, %v817
      %v830 = vmul.f32 %v498, %v817
      %v831 = vmul.f32 %v499, %v817
      %v832 = vmul.f32 %v500, %v821
      %v833 = vmul.f32 %v501, %v821
      %v834 = vmul.f32 %v502, %v821
      %835 = vset.pattern.permute.xlu0 4
      %836 = vperm.xlu0 %835, %v343
      %v837 = vpop.permute.xlu0 %836
      %839 = vset.pattern.permute.xlu0 4
      %840 = vperm.xlu0 %839, %v344
      %v841 = vpop.permute.xlu0 %840
      %843 = vset.pattern.permute.xlu0 4
      %844 = vperm.xlu0 %843, %v345
      %v845 = vpop.permute.xlu0 %844
      %847 = vset.pattern.permute.xlu0 4
      %848 = vperm.xlu0 %847, %v346
      %v849 = vpop.permute.xlu0 %848
      %v851 = vmul.f32 %v492, %v837
      %v852 = vmul.f32 %v493, %v837
      %v853 = vmul.f32 %v495, %v841
      %v854 = vmul.f32 %v496, %v841
      %v855 = vmul.f32 %v498, %v845
      %v856 = vmul.f32 %v499, %v845
      %v857 = vmul.f32 %v501, %v849
      %v858 = vmul.f32 %v502, %v849
      %867 = vrot.lane.b32.xlu0 %v851, 112
      %v868 = vpop.permute.xlu0 %867
      %869 = vrot.lane.b32.xlu0 %v852, 112
      %v870 = vpop.permute.xlu0 %869
      %871 = vrot.lane.b32.xlu0 %v853, 112
      %v872 = vpop.permute.xlu0 %871
      %873 = vrot.lane.b32.xlu0 %v854, 112
      %v874 = vpop.permute.xlu0 %873
      %875 = vrot.lane.b32.xlu0 %v855, 112
      %v876 = vpop.permute.xlu0 %875
      %877 = vrot.lane.b32.xlu0 %v856, 112
      %v878 = vpop.permute.xlu0 %877
      %879 = vrot.lane.b32.xlu0 %v857, 112
      %v880 = vpop.permute.xlu0 %879
      %881 = vrot.lane.b32.xlu0 %v858, 112
      %v882 = vpop.permute.xlu0 %881
      %v883 = vsel %vm599, %v868, %v870
      %v884 = vsel %vm599, %v872, %v874
      %v885 = vsel %vm599, %v876, %v878
      %v886 = vsel %vm599, %v880, %v882
      %v899 = vadd.f32 %v823, %v868
      %v900 = vadd.f32 %v824, %v883
      %v901 = vadd.f32 %v825, %v870
      %v902 = vadd.f32 %v826, %v872
      %v903 = vadd.f32 %v827, %v884
      %v904 = vadd.f32 %v828, %v874
      %v905 = vadd.f32 %v829, %v876
      %v906 = vadd.f32 %v830, %v885
      %v907 = vadd.f32 %v831, %v878
      %v908 = vadd.f32 %v832, %v880
      %v909 = vadd.f32 %v833, %v886
      %v910 = vadd.f32 %v834, %v882
      %911 = vset.pattern.permute.xlu0 7
      %912 = vperm.xlu0 %911, %v343
      %v913 = vpop.permute.xlu0 %912
      %915 = vset.pattern.permute.xlu0 7
      %916 = vperm.xlu0 %915, %v344
      %v917 = vpop.permute.xlu0 %916
      %919 = vset.pattern.permute.xlu0 7
      %920 = vperm.xlu0 %919, %v345
      %v921 = vpop.permute.xlu0 %920
      %923 = vset.pattern.permute.xlu0 7
      %924 = vperm.xlu0 %923, %v346
      %v925 = vpop.permute.xlu0 %924
      %v927 = vmul.f32 %v638, %v913
      %v928 = vmul.f32 %v639, %v913
      %v929 = vmul.f32 %v640, %v913
      %v930 = vmul.f32 %v641, %v917
      %v931 = vmul.f32 %v642, %v917
      %v932 = vmul.f32 %v643, %v917
      %v933 = vmul.f32 %v644, %v921
      %v934 = vmul.f32 %v645, %v921
      %v935 = vmul.f32 %v646, %v921
      %v936 = vmul.f32 %v647, %v925
      %v937 = vmul.f32 %v648, %v925
      %v938 = vmul.f32 %v649, %v925
      %951 = vrot.lane.b32.xlu0 %v927, 96
      %v952 = vpop.permute.xlu0 %951
      %953 = vrot.lane.b32.xlu0 %v928, 96
      %v954 = vpop.permute.xlu0 %953
      %955 = vrot.lane.b32.xlu0 %v929, 96
      %v956 = vpop.permute.xlu0 %955
      %957 = vrot.lane.b32.xlu0 %v930, 96
      %v958 = vpop.permute.xlu0 %957
      %959 = vrot.lane.b32.xlu0 %v931, 96
      %v960 = vpop.permute.xlu0 %959
      %961 = vrot.lane.b32.xlu0 %v932, 96
      %v962 = vpop.permute.xlu0 %961
      %963 = vrot.lane.b32.xlu0 %v933, 96
      %v964 = vpop.permute.xlu0 %963
      %965 = vrot.lane.b32.xlu0 %v934, 96
      %v966 = vpop.permute.xlu0 %965
      %967 = vrot.lane.b32.xlu0 %v935, 96
      %v968 = vpop.permute.xlu0 %967
      %969 = vrot.lane.b32.xlu0 %v936, 96
      %v970 = vpop.permute.xlu0 %969
      %971 = vrot.lane.b32.xlu0 %v937, 96
      %v972 = vpop.permute.xlu0 %971
      %973 = vrot.lane.b32.xlu0 %v938, 96
      %v974 = vpop.permute.xlu0 %973
      %v975 = vsel %vm714, %v952, %v954
      %v976 = vsel %vm714, %v954, %v956
      %v977 = vsel %vm714, %v958, %v960
      %v978 = vsel %vm714, %v960, %v962
      %v979 = vsel %vm714, %v964, %v966
      %v980 = vsel %vm714, %v966, %v968
      %v981 = vsel %vm714, %v970, %v972
      %v982 = vsel %vm714, %v972, %v974
      %v995 = vadd.f32 %v899, %v952
      %v996 = vadd.f32 %v900, %v975
      %v997 = vadd.f32 %v901, %v976
      %v998 = vadd.f32 %v902, %v958
      %v999 = vadd.f32 %v903, %v977
      %v1000 = vadd.f32 %v904, %v978
      %v1001 = vadd.f32 %v905, %v964
      %v1002 = vadd.f32 %v906, %v979
      %v1003 = vadd.f32 %v907, %v980
      %v1004 = vadd.f32 %v908, %v970
      %v1005 = vadd.f32 %v909, %v981
      %v1006 = vadd.f32 %v910, %v982
      %1019 = vrot.lane.b32.xlu0 %v995, 16
      %v1020 = vpop.permute.xlu0 %1019
      %1021 = vrot.lane.b32.xlu0 %v996, 16
      %v1022 = vpop.permute.xlu0 %1021
      %1023 = vrot.lane.b32.xlu0 %v997, 16
      %v1024 = vpop.permute.xlu0 %1023
      %1025 = vrot.lane.b32.xlu0 %v998, 16
      %v1026 = vpop.permute.xlu0 %1025
      %1027 = vrot.lane.b32.xlu0 %v999, 16
      %v1028 = vpop.permute.xlu0 %1027
      %1029 = vrot.lane.b32.xlu0 %v1000, 16
      %v1030 = vpop.permute.xlu0 %1029
      %1031 = vrot.lane.b32.xlu0 %v1001, 16
      %v1032 = vpop.permute.xlu0 %1031
      %1033 = vrot.lane.b32.xlu0 %v1002, 16
      %v1034 = vpop.permute.xlu0 %1033
      %1035 = vrot.lane.b32.xlu0 %v1003, 16
      %v1036 = vpop.permute.xlu0 %1035
      %1037 = vrot.lane.b32.xlu0 %v1004, 16
      %v1038 = vpop.permute.xlu0 %1037
      %1039 = vrot.lane.b32.xlu0 %v1005, 16
      %v1040 = vpop.permute.xlu0 %1039
      %1041 = vrot.lane.b32.xlu0 %v1006, 16
      %v1042 = vpop.permute.xlu0 %1041
      %vm1043 = vcmask 130048
      %v1044 = vsel %vm1043, %v1020, %v1022
      %v1045 = vsel %vm1043, %v1022, %v1024
      %v1046 = vsel %vm1043, %v1026, %v1028
      %v1047 = vsel %vm1043, %v1028, %v1030
      %v1048 = vsel %vm1043, %v1032, %v1034
      %v1049 = vsel %vm1043, %v1034, %v1036
      %v1050 = vsel %vm1043, %v1038, %v1040
      %v1051 = vsel %vm1043, %v1040, %v1042
      %v1060 = vadd.f32 %v799, %v1044
      %v1061 = vadd.f32 %v800, %v1045
      %v1062 = vadd.f32 %v801, %v1046
      %v1063 = vadd.f32 %v802, %v1047
      %v1064 = vadd.f32 %v803, %v1048
      %v1065 = vadd.f32 %v804, %v1049
      %v1066 = vadd.f32 %v805, %v1050
      %v1067 = vadd.f32 %v806, %v1051
      %1068 = vset.pattern.permute.xlu0 2
      %1069 = vperm.xlu0 %1068, %v343
      %v1070 = vpop.permute.xlu0 %1069
      %1072 = vset.pattern.permute.xlu0 2
      %1073 = vperm.xlu0 %1072, %v344
      %v1074 = vpop.permute.xlu0 %1073
      %1076 = vset.pattern.permute.xlu0 2
      %1077 = vperm.xlu0 %1076, %v345
      %v1078 = vpop.permute.xlu0 %1077
      %1080 = vset.pattern.permute.xlu0 2
      %1081 = vperm.xlu0 %1080, %v346
      %v1082 = vpop.permute.xlu0 %1081
      %v1084 = vmul.f32 %v491, %v1070
      %v1085 = vmul.f32 %v492, %v1070
      %v1086 = vmul.f32 %v493, %v1070
      %v1087 = vmul.f32 %v494, %v1074
      %v1088 = vmul.f32 %v495, %v1074
      %v1089 = vmul.f32 %v496, %v1074
      %v1090 = vmul.f32 %v497, %v1078
      %v1091 = vmul.f32 %v498, %v1078
      %v1092 = vmul.f32 %v499, %v1078
      %v1093 = vmul.f32 %v500, %v1082
      %v1094 = vmul.f32 %v501, %v1082
      %v1095 = vmul.f32 %v502, %v1082
      %1096 = vset.pattern.permute.xlu0 5
      %1097 = vperm.xlu0 %1096, %v343
      %v1098 = vpop.permute.xlu0 %1097
      %1100 = vset.pattern.permute.xlu0 5
      %1101 = vperm.xlu0 %1100, %v344
      %v1102 = vpop.permute.xlu0 %1101
      %1104 = vset.pattern.permute.xlu0 5
      %1105 = vperm.xlu0 %1104, %v345
      %v1106 = vpop.permute.xlu0 %1105
      %1108 = vset.pattern.permute.xlu0 5
      %1109 = vperm.xlu0 %1108, %v346
      %v1110 = vpop.permute.xlu0 %1109
      %v1112 = vmul.f32 %v638, %v1098
      %v1113 = vmul.f32 %v639, %v1098
      %v1114 = vmul.f32 %v640, %v1098
      %v1115 = vmul.f32 %v641, %v1102
      %v1116 = vmul.f32 %v642, %v1102
      %v1117 = vmul.f32 %v643, %v1102
      %v1118 = vmul.f32 %v644, %v1106
      %v1119 = vmul.f32 %v645, %v1106
      %v1120 = vmul.f32 %v646, %v1106
      %v1121 = vmul.f32 %v647, %v1110
      %v1122 = vmul.f32 %v648, %v1110
      %v1123 = vmul.f32 %v649, %v1110
      %1136 = vrot.lane.b32.xlu0 %v1112, 112
      %v1137 = vpop.permute.xlu0 %1136
      %1138 = vrot.lane.b32.xlu0 %v1113, 112
      %v1139 = vpop.permute.xlu0 %1138
      %1140 = vrot.lane.b32.xlu0 %v1114, 112
      %v1141 = vpop.permute.xlu0 %1140
      %1142 = vrot.lane.b32.xlu0 %v1115, 112
      %v1143 = vpop.permute.xlu0 %1142
      %1144 = vrot.lane.b32.xlu0 %v1116, 112
      %v1145 = vpop.permute.xlu0 %1144
      %1146 = vrot.lane.b32.xlu0 %v1117, 112
      %v1147 = vpop.permute.xlu0 %1146
      %1148 = vrot.lane.b32.xlu0 %v1118, 112
      %v1149 = vpop.permute.xlu0 %1148
      %1150 = vrot.lane.b32.xlu0 %v1119, 112
      %v1151 = vpop.permute.xlu0 %1150
      %1152 = vrot.lane.b32.xlu0 %v1120, 112
      %v1153 = vpop.permute.xlu0 %1152
      %1154 = vrot.lane.b32.xlu0 %v1121, 112
      %v1155 = vpop.permute.xlu0 %1154
      %1156 = vrot.lane.b32.xlu0 %v1122, 112
      %v1157 = vpop.permute.xlu0 %1156
      %1158 = vrot.lane.b32.xlu0 %v1123, 112
      %v1159 = vpop.permute.xlu0 %1158
      %v1160 = vsel %vm599, %v1137, %v1139
      %v1161 = vsel %vm599, %v1139, %v1141
      %v1162 = vsel %vm599, %v1143, %v1145
      %v1163 = vsel %vm599, %v1145, %v1147
      %v1164 = vsel %vm599, %v1149, %v1151
      %v1165 = vsel %vm599, %v1151, %v1153
      %v1166 = vsel %vm599, %v1155, %v1157
      %v1167 = vsel %vm599, %v1157, %v1159
      %v1180 = vadd.f32 %v1084, %v1137
      %v1181 = vadd.f32 %v1085, %v1160
      %v1182 = vadd.f32 %v1086, %v1161
      %v1183 = vadd.f32 %v1087, %v1143
      %v1184 = vadd.f32 %v1088, %v1162
      %v1185 = vadd.f32 %v1089, %v1163
      %v1186 = vadd.f32 %v1090, %v1149
      %v1187 = vadd.f32 %v1091, %v1164
      %v1188 = vadd.f32 %v1092, %v1165
      %v1189 = vadd.f32 %v1093, %v1155
      %v1190 = vadd.f32 %v1094, %v1166
      %v1191 = vadd.f32 %v1095, %v1167
      %1192 = vset.pattern.permute.xlu0 8
      %1193 = vperm.xlu0 %1192, %v343
      %v1194 = vpop.permute.xlu0 %1193
      %1196 = vset.pattern.permute.xlu0 8
      %1197 = vperm.xlu0 %1196, %v344
      %v1198 = vpop.permute.xlu0 %1197
      %1200 = vset.pattern.permute.xlu0 8
      %1201 = vperm.xlu0 %1200, %v345
      %v1202 = vpop.permute.xlu0 %1201
      %1204 = vset.pattern.permute.xlu0 8
      %1205 = vperm.xlu0 %1204, %v346
      %v1206 = vpop.permute.xlu0 %1205
      %v1208 = vmul.f32 %v638, %v1194
      %v1209 = vmul.f32 %v639, %v1194
      %v1210 = vmul.f32 %v640, %v1194
      %v1211 = vmul.f32 %v641, %v1198
      %v1212 = vmul.f32 %v642, %v1198
      %v1213 = vmul.f32 %v643, %v1198
      %v1214 = vmul.f32 %v644, %v1202
      %v1215 = vmul.f32 %v645, %v1202
      %v1216 = vmul.f32 %v646, %v1202
      %v1217 = vmul.f32 %v647, %v1206
      %v1218 = vmul.f32 %v648, %v1206
      %v1219 = vmul.f32 %v649, %v1206
      %1232 = vrot.lane.b32.xlu0 %v1208, 96
      %v1233 = vpop.permute.xlu0 %1232
      %1234 = vrot.lane.b32.xlu0 %v1209, 96
      %v1235 = vpop.permute.xlu0 %1234
      %1236 = vrot.lane.b32.xlu0 %v1210, 96
      %v1237 = vpop.permute.xlu0 %1236
      %1238 = vrot.lane.b32.xlu0 %v1211, 96
      %v1239 = vpop.permute.xlu0 %1238
      %1240 = vrot.lane.b32.xlu0 %v1212, 96
      %v1241 = vpop.permute.xlu0 %1240
      %1242 = vrot.lane.b32.xlu0 %v1213, 96
      %v1243 = vpop.permute.xlu0 %1242
      %1244 = vrot.lane.b32.xlu0 %v1214, 96
      %v1245 = vpop.permute.xlu0 %1244
      %1246 = vrot.lane.b32.xlu0 %v1215, 96
      %v1247 = vpop.permute.xlu0 %1246
      %1248 = vrot.lane.b32.xlu0 %v1216, 96
      %v1249 = vpop.permute.xlu0 %1248
      %1250 = vrot.lane.b32.xlu0 %v1217, 96
      %v1251 = vpop.permute.xlu0 %1250
      %1252 = vrot.lane.b32.xlu0 %v1218, 96
      %v1253 = vpop.permute.xlu0 %1252
      %1254 = vrot.lane.b32.xlu0 %v1219, 96
      %v1255 = vpop.permute.xlu0 %1254
      %v1256 = vsel %vm714, %v1233, %v1235
      %v1257 = vsel %vm714, %v1235, %v1237
      %v1258 = vsel %vm714, %v1239, %v1241
      %v1259 = vsel %vm714, %v1241, %v1243
      %v1260 = vsel %vm714, %v1245, %v1247
      %v1261 = vsel %vm714, %v1247, %v1249
      %v1262 = vsel %vm714, %v1251, %v1253
      %v1263 = vsel %vm714, %v1253, %v1255
      %v1276 = vadd.f32 %v1180, %v1233
      %v1277 = vadd.f32 %v1181, %v1256
      %v1278 = vadd.f32 %v1182, %v1257
      %v1279 = vadd.f32 %v1183, %v1239
      %v1280 = vadd.f32 %v1184, %v1258
      %v1281 = vadd.f32 %v1185, %v1259
      %v1282 = vadd.f32 %v1186, %v1245
      %v1283 = vadd.f32 %v1187, %v1260
      %v1284 = vadd.f32 %v1188, %v1261
      %v1285 = vadd.f32 %v1189, %v1251
      %v1286 = vadd.f32 %v1190, %v1262
      %v1287 = vadd.f32 %v1191, %v1263
      %1300 = vrot.lane.b32.xlu0 %v1276, 15
      %v1301 = vpop.permute.xlu0 %1300
      %1302 = vrot.lane.b32.xlu0 %v1277, 15
      %v1303 = vpop.permute.xlu0 %1302
      %1304 = vrot.lane.b32.xlu0 %v1278, 15
      %v1305 = vpop.permute.xlu0 %1304
      %1306 = vrot.lane.b32.xlu0 %v1279, 15
      %v1307 = vpop.permute.xlu0 %1306
      %1308 = vrot.lane.b32.xlu0 %v1280, 15
      %v1309 = vpop.permute.xlu0 %1308
      %1310 = vrot.lane.b32.xlu0 %v1281, 15
      %v1311 = vpop.permute.xlu0 %1310
      %1312 = vrot.lane.b32.xlu0 %v1282, 15
      %v1313 = vpop.permute.xlu0 %1312
      %1314 = vrot.lane.b32.xlu0 %v1283, 15
      %v1315 = vpop.permute.xlu0 %1314
      %1316 = vrot.lane.b32.xlu0 %v1284, 15
      %v1317 = vpop.permute.xlu0 %1316
      %1318 = vrot.lane.b32.xlu0 %v1285, 15
      %v1319 = vpop.permute.xlu0 %1318
      %1320 = vrot.lane.b32.xlu0 %v1286, 15
      %v1321 = vpop.permute.xlu0 %1320
      %1322 = vrot.lane.b32.xlu0 %v1287, 15
      %v1323 = vpop.permute.xlu0 %1322
      %vm1324 = vcmask 121856
      %v1325 = vsel %vm1324, %v1301, %v1303
      %v1326 = vsel %vm1324, %v1303, %v1305
      %v1327 = vsel %vm1324, %v1307, %v1309
      %v1328 = vsel %vm1324, %v1309, %v1311
      %v1329 = vsel %vm1324, %v1313, %v1315
      %v1330 = vsel %vm1324, %v1315, %v1317
      %v1331 = vsel %vm1324, %v1319, %v1321
      %v1332 = vsel %vm1324, %v1321, %v1323
      %v1341 = vsel %vm341, %v1325, 0.0
      %v1342 = vsel %vm342, %v1326, 0.0
      %v1343 = vsel %vm341, %v1327, 0.0
      %v1344 = vsel %vm342, %v1328, 0.0
      %v1345 = vsel %vm341, %v1329, 0.0
      %v1346 = vsel %vm342, %v1330, 0.0
      %v1347 = vsel %vm341, %v1331, 0.0
      %v1348 = vsel %vm342, %v1332, 0.0
      %v1349 = vadd.f32 %v1060, %v1341
      %v1350 = vadd.f32 %v1061, %v1342
      %v1351 = vadd.f32 %v1062, %v1343
      %v1352 = vadd.f32 %v1063, %v1344
      %v1353 = vadd.f32 %v1064, %v1345
      %v1354 = vadd.f32 %v1065, %v1346
      %v1355 = vadd.f32 %v1066, %v1347
      %v1356 = vadd.f32 %v1067, %v1348
      %1358 = vset.pattern.permute.xlu0 0
      %1359 = vperm.xlu0 %1358, %v347
      %v1360 = vpop.permute.xlu0 %1359
      %1363 = vset.pattern.permute.xlu0 0
      %1364 = vperm.xlu0 %1363, %v348
      %v1365 = vpop.permute.xlu0 %1364
      %1368 = vset.pattern.permute.xlu0 0
      %1369 = vperm.xlu0 %1368, %v349
      %v1370 = vpop.permute.xlu0 %1369
      %1373 = vset.pattern.permute.xlu0 0
      %1374 = vperm.xlu0 %1373, %v350
      %v1375 = vpop.permute.xlu0 %1374
      %v1377 = vadd.f32 %v1349, %v1360
      %v1378 = vadd.f32 %v1350, %v1360
      %v1379 = vadd.f32 %v1351, %v1365
      %v1380 = vadd.f32 %v1352, %v1365
      %v1381 = vadd.f32 %v1353, %v1370
      %v1382 = vadd.f32 %v1354, %v1370
      %v1383 = vadd.f32 %v1355, %v1375
      %v1384 = vadd.f32 %v1356, %v1375
      %v1385 = vmax.f32 %v1377, 0.0
      %v1386 = vmax.f32 %v1378, 0.0
      %v1387 = vmax.f32 %v1379, 0.0
      %v1388 = vmax.f32 %v1380, 0.0
      %v1389 = vmax.f32 %v1381, 0.0
      %v1390 = vmax.f32 %v1382, 0.0
      %v1391 = vmax.f32 %v1383, 0.0
      %v1392 = vmax.f32 %v1384, 0.0
      %v1393 = vld [vmem:[%s4] sm:$0xff]
      %v1394 = vld [vmem:[%s4 + $0x8] sm:$0xff]
      %v1395 = vld [vmem:[%s4 + $0x10] sm:$0xff]
      %v1396 = vld [vmem:[%s4 + $0x18] sm:$0xff]
      %1398 = vset.pattern.permute.xlu0 0
      %1399 = vperm.xlu0 %1398, %v351
      %v1400 = vpop.permute.xlu0 %1399
      %1403 = vset.pattern.permute.xlu0 0
      %1404 = vperm.xlu0 %1403, %v352
      %v1405 = vpop.permute.xlu0 %1404
      %1408 = vset.pattern.permute.xlu0 0
      %1409 = vperm.xlu0 %1408, %v353
      %v1410 = vpop.permute.xlu0 %1409
      %1413 = vset.pattern.permute.xlu0 0
      %1414 = vperm.xlu0 %1413, %v354
      %v1415 = vpop.permute.xlu0 %1414
      %v1418 = vsel %vm375, %v1393, 0
      %v1421 = vsel %vm375, %v1394, 0
      %v1424 = vsel %vm375, %v1395, 0
      %v1427 = vsel %vm375, %v1396, 0
      %1429 = vmatprep.subr.mxu0 %v1386
      %1430 = vmatpush1.msra.mxu0 %v1385
      %1431 = vmatprep.subr.mxu0 %v1388
      %1432 = vmatpush1.msra.mxu0 %v1387
      %1433 = vmatprep.subr.mxu0 %v1390
      %1434 = vmatpush1.msra.mxu0 %v1389
      %1435 = vmatprep.subr.mxu0 %v1392
      %1436 = vmatpush1.msra.mxu0 %v1391
      %1437 = vmatprep.subr.mxu0 0.0
      %1438 = vmatpush1.msra.mxu0 0.0
      %1439 = vmatprep.subr.mxu0 0.0
      %1440 = vmatpush1.msra.mxu0 0.0
      %1441 = vmatprep.subr.mxu0 0.0
      %1442 = vmatpush1.msra.mxu0 0.0
      %1443 = vmatprep.subr.mxu0 0.0
      %1444 = vmatpush1.msra.mxu0 0.0
      %1445 = vmatprep.subr.mxu0 0.0
      %1446 = vmatpush1.msra.mxu0 0.0
      %1447 = vmatprep.subr.mxu0 0.0
      %1448 = vmatpush1.msra.mxu0 0.0
      %1449 = vmatprep.subr.mxu0 0.0
      %1450 = vmatpush1.msra.mxu0 0.0
      %1451 = vmatprep.subr.mxu0 0.0
      %1452 = vmatpush1.msra.mxu0 0.0
      %1453 = vmatprep.subr.mxu0 0.0
      %1454 = vmatpush1.msra.mxu0 0.0
      %1455 = vmatprep.subr.mxu0 0.0
      %1456 = vmatpush1.msra.mxu0 0.0
      %1457 = vmatprep.subr.mxu0 0.0
      %1458 = vmatpush1.msra.mxu0 0.0
      %1459 = vmatprep.subr.mxu0 0.0
      %1460 = vmatpush1.msra.mxu0 0.0
      %1461 = vmatprep.subr.mxu0 0.0
      %1462 = vmatpush1.msra.mxu0 0.0
      %1463 = vmatprep.subr.mxu0 0.0
      %1464 = vmatpush1.msra.mxu0 0.0
      %1465 = vmatprep.subr.mxu0 0.0
      %1466 = vmatpush1.msra.mxu0 0.0
      %1467 = vmatprep.subr.mxu0 0.0
      %1468 = vmatpush1.msra.mxu0 0.0
      %1469 = vmatprep.subr.mxu0 0.0
      %1470 = vmatpush1.msra.mxu0 0.0
      %1471 = vmatprep.subr.mxu0 0.0
      %1472 = vmatpush1.msra.mxu0 0.0
      %1473 = vmatprep.subr.mxu0 0.0
      %1474 = vmatpush1.msra.mxu0 0.0
      %1475 = vmatprep.subr.mxu0 0.0
      %1476 = vmatpush1.msra.mxu0 0.0
      %1477 = vmatprep.subr.mxu0 0.0
      %1478 = vmatpush1.msra.mxu0 0.0
      %1479 = vmatprep.subr.mxu0 0.0
      %1480 = vmatpush1.msra.mxu0 0.0
      %1481 = vmatprep.subr.mxu0 0.0
      %1482 = vmatpush1.msra.mxu0 0.0
      %1483 = vmatprep.subr.mxu0 0.0
      %1484 = vmatpush1.msra.mxu0 0.0
      %1485 = vmatprep.subr.mxu0 0.0
      %1486 = vmatpush1.msra.mxu0 0.0
      %1487 = vmatprep.subr.mxu0 0.0
      %1488 = vmatpush1.msra.mxu0 0.0
      %1489 = vmatprep.subr.mxu0 0.0
      %1490 = vmatpush1.msra.mxu0 0.0
      %1491 = vmatprep.subr.mxu0 0.0
      %1492 = vmatpush1.msra.mxu0 0.0
      %1493 = vmatprep.mubr.f32.mxu0 0.0
      %1494 = vmatmul.mubr.f32.gmra.mrb[0].mxu0 %v1418
      %v1495 = vpop.f32.mrb[0].mxu0
      %v1496 = vadd.f32 %v1400, %v1495
      %v1497 = vpop.f32.mrb[0].mxu0
      %v1498 = vadd.f32 %v1400, %v1497
      %1499 = vmatprep.mubr.f32.mxu0 0.0
      %1500 = vmatmul.mubr.f32.gmra.mrb[0].mxu0 %v1421
      %v1501 = vpop.f32.mrb[0].mxu0
      %v1502 = vadd.f32 %v1405, %v1501
      %v1503 = vpop.f32.mrb[0].mxu0
      %v1504 = vadd.f32 %v1405, %v1503
      %1505 = vmatprep.mubr.f32.mxu0 0.0
      %1506 = vmatmul.mubr.f32.gmra.mrb[0].mxu0 %v1424
      %v1507 = vpop.f32.mrb[0].mxu0
      %v1508 = vadd.f32 %v1410, %v1507
      %v1509 = vpop.f32.mrb[0].mxu0
      %v1510 = vadd.f32 %v1410, %v1509
      %1511 = vmatprep.mubr.f32.mxu0 0.0
      %1512 = vmatmul.mubr.f32.gmra.mrb[0].mxu0 %v1427
      %v1513 = vpop.f32.mrb[0].mxu0
      %v1514 = vadd.f32 %v1415, %v1513
      %v1515 = vpop.f32.mrb[0].mxu0
      %v1516 = vadd.f32 %v1415, %v1515
      %1517 = vdwg.mxu0
      %v1518 = vmax.f32 %v1496, 0.0
      %v1519 = vmax.f32 %v1498, 0.0
      %v1520 = vmax.f32 %v1502, 0.0
      %v1521 = vmax.f32 %v1504, 0.0
      %v1522 = vmax.f32 %v1508, 0.0
      %v1523 = vmax.f32 %v1510, 0.0
      %v1524 = vmax.f32 %v1514, 0.0
      %v1525 = vmax.f32 %v1516, 0.0
      %v1526 = vadd.f32 %v1518, %v1519
      %1527 = vadd.xlane.f32.xlu0 %v1526
      %v1528 = vpop.xlane.xlu0 %1527
      %v1529 = vadd.f32 %v1520, %v1521
      %1530 = vadd.xlane.f32.xlu0 %v1529
      %v1531 = vpop.xlane.xlu0 %1530
      %v1532 = vadd.f32 %v1522, %v1523
      %1533 = vadd.xlane.f32.xlu0 %v1532
      %v1534 = vpop.xlane.xlu0 %1533
      %v1535 = vadd.f32 %v1524, %v1525
      %1536 = vadd.xlane.f32.xlu0 %v1535
      %v1537 = vpop.xlane.xlu0 %1536
      %v1538 = vmul.f32 %v1528, 0.00390625
      %v1539 = vmul.f32 %v1531, 0.00390625
      %v1540 = vmul.f32 %v1534, 0.00390625
      %v1541 = vmul.f32 %v1537, 0.00390625
      %v1542 = vmul.f32 %v355, %v1538
      %v1543 = vmul.f32 %v356, %v1539
      %v1544 = vmul.f32 %v357, %v1540
      %v1545 = vmul.f32 %v358, %v1541
      %vm1546 = vcmask 15360
      %v1547 = vsel %vm1546, %v1542, 0.0
      %v1548 = vsel %vm1546, %v1543, 0.0
      %v1549 = vadd.f32 %v1547, %v1548
      %v1550 = vsel %vm1546, %v1544, 0.0
      %v1551 = vadd.f32 %v1549, %v1550
      %v1552 = vsel %vm1546, %v1545, 0.0
      %v1553 = vadd.f32 %v1551, %v1552
      %v1554 = vrot.slane %v1553, 4
      %v1555 = vadd.f32 %v1553, %v1554
      %v1556 = vrot.slane %v1555, 2
      %v1557 = vadd.f32 %v1555, %v1556
      %v1558 = vrot.slane %v1557, 1
      %v1559 = vadd.f32 %v1557, %v1558
      %v1560 = vmax.f32 %v1559, 0.0
      %v1561 = vmul.f32 %v359, %v1560
      %v1562 = vmul.f32 %v360, %v1560
      %v1563 = vmul.f32 %v361, %v1560
      %v1564 = vmul.f32 %v362, %v1560
      %v1565 = vsel %vm1546, %v1561, 0.0
      %1566 = vadd.xlane.f32.xlu0 %v1565
      %v1567 = vpop.xlane.xlu0 %1566
      %v1568 = vsel %vm1546, %v1562, 0.0
      %1569 = vadd.xlane.f32.xlu0 %v1568
      %v1570 = vpop.xlane.xlu0 %1569
      %v1571 = vsel %vm1546, %v1563, 0.0
      %1572 = vadd.xlane.f32.xlu0 %v1571
      %v1573 = vpop.xlane.xlu0 %1572
      %v1574 = vsel %vm1546, %v1564, 0.0
      %1575 = vadd.xlane.f32.xlu0 %v1574
      %v1576 = vpop.xlane.xlu0 %1575
      %v1577 = vsub.f32 0.0, %v1567
      %v1578 = vsub.f32 0.0, %v1570
      %v1579 = vsub.f32 0.0, %v1573
      %v1580 = vsub.f32 0.0, %v1576
      %v1581 = vmul.f32 %v1577, 1.442695
      %v1582 = vpow.pop %v1581
      %v1583 = vmul.f32 %v1578, 1.442695
      %v1584 = vpow.pop %v1583
      %v1585 = vmul.f32 %v1579, 1.442695
      %v1586 = vpow.pop %v1585
      %v1587 = vmul.f32 %v1580, 1.442695
      %v1588 = vpow.pop %v1587
      %v1589 = vadd.f32 %v1582, 1.0
      %v1590 = vadd.f32 %v1584, 1.0
      %v1591 = vadd.f32 %v1586, 1.0
      %v1592 = vadd.f32 %v1588, 1.0
      %v1593 = vrcp.pop %v1589
      %v1594 = vmul.f32 1.0, %v1593
      %v1595 = vrcp.pop %v1590
      %v1596 = vmul.f32 1.0, %v1595
      %v1597 = vrcp.pop %v1591
      %v1598 = vmul.f32 1.0, %v1597
      %v1599 = vrcp.pop %v1592
      %v1600 = vmul.f32 1.0, %v1599
      %v1601 = vmul.f32 %v1518, %v1594
      %v1602 = vmul.f32 %v1519, %v1594
      %v1603 = vmul.f32 %v1520, %v1596
      %v1604 = vmul.f32 %v1521, %v1596
      %v1605 = vmul.f32 %v1522, %v1598
      %v1606 = vmul.f32 %v1523, %v1598
      %v1607 = vmul.f32 %v1524, %v1600
      %v1608 = vmul.f32 %v1525, %v1600
      %v1609 = vadd.f32 %v1601, %v363
      %v1610 = vadd.f32 %v1602, %v364
      %v1611 = vadd.f32 %v1603, %v365
      %v1612 = vadd.f32 %v1604, %v366
      %v1613 = vadd.f32 %v1605, %v367
      %v1614 = vadd.f32 %v1606, %v368
      %v1615 = vadd.f32 %v1607, %v369
      %v1616 = vadd.f32 %v1608, %v370
      %1617 = vst [vmem:[%s305] sm:$0xff] %v1609
      %1618 = vst [vmem:[%s305 + $0x8] sm:$0xff] %v1610
      %1619 = vst [vmem:[%s305 + $0x10] sm:$0xff] %v1611
      %1620 = vst [vmem:[%s305 + $0x18] sm:$0xff] %v1612
      %1621 = vst [vmem:[%s305 + $0x20] sm:$0xff] %v1613
      %1622 = vst [vmem:[%s305 + $0x28] sm:$0xff] %v1614
      %1623 = vst [vmem:[%s305 + $0x30] sm:$0xff] %v1615
      %1624 = vst [vmem:[%s305 + $0x38] sm:$0xff] %v1616
      %p1625 = scmp.lt.s32.totalorder %s19, 1
      %s1626 = scalar_select %p1625, %s19, 1
      %s1627 = smul.addr %s1626, 8
      %s1628 = smul.addr %s1627, 8
      %s1629 = scalar_lea.vmem %s8, %s1628
      // Predicated region
      $region53: #{fr_pdp_block_forward.1} parent=51 // pred_check
        %p1630 = pneg %p210
      $region54: #{fr_pdp_block_forward.1} parent=51 // pred_check_branch
        %1632 = sbr.rel (%p1630) target = $region56
      $region55: #{fr_pdp_block_forward.1} parent=51 // pred_region
        _
      $region56: #{fr_pdp_block_forward.1} parent=51 // pred_fallthru
        _
    $region52: #{fr_pdp_block_forward.1} parent=5 // pred_fallthru
      _
    %p1633 = scmp.le.s32.totalorder 2, %s14
    // Predicated region
    $region57: #{fr_pdp_block_forward.1} parent=5 // pred_check
      %p1634 = pneg %p1633
    $region58: #{fr_pdp_block_forward.1} parent=5 // pred_check_branch
      %1636 = sbr.rel (%p1634) target = $region60
    $region59: #{fr_pdp_block_forward.1} parent=5 // pred_region
      %s1637 = ssub.s32 %s14, 2
      // Predicated region
      $region61: #{fr_pdp_block_forward.1} parent=59 // pred_check
        %p1638 = pneg %p216
      $region62: #{fr_pdp_block_forward.1} parent=59 // pred_check_branch
        %1640 = sbr.rel (%p1638) target = $region64
      $region63: #{fr_pdp_block_forward.1} parent=59 // pred_region
        %p1641 = scmp.lt.s32.totalorder %s20, 1
        %s1642 = scalar_select %p1641, %s20, 1
        %s1643 = smul.addr %s1642, 8
        %s1644 = smul.addr %s1643, 8
        %s1645 = scalar_lea.vmem %s8, %s1644
      $region64: #{fr_pdp_block_forward.1} parent=59 // pred_fallthru
        _
    $region60: #{fr_pdp_block_forward.1} parent=5 // pred_fallthru
      _
  $region6: #{fr_pdp_block_forward.1} parent=0 // loop_footer
    %s18 = sadd.s32 1, %s14
  $region7: #{fr_pdp_block_forward.1} parent=0 // loop_footer_branch
    %13 = sbr.rel target = $region3
  $region8: #{fr_pdp_block_forward.1} parent=0 // loop_exit
    _

</llo_original>
